<compile_context>
chip_gen: v6e
topology: v6e:2x2x1
jax: 0.10.0
libtpu: 0.0.40
codegen_flags: <defaults>
</compile_context>

<pallas_src>
import functools

import jax
import jax.numpy as jnp
from jax.experimental import pallas as pl
from jax.experimental.pallas import tpu as pltpu

IN_DIM = 768
HID_DIM = 768
NUM_CLASSES = 7
PAD_CLASSES = 128          # lane-padded logits width (multiple of 128)
NEG_BIG = -1e30            # "minus infinity" for padded class lanes (finite for safety)


def _disc_kernel(x_ref, w1_ref, b1_ref, w2_ref, b2_ref,
                 feat_ref, logit_ref, prob_ref):
    x = x_ref[...]                                                   # [TM, 768] bf16

    # Linear(768,768): bf16 operands, f32 accumulate; bias + LeakyReLU(0.2) in f32.
    h = jnp.dot(x, w1_ref[...], preferred_element_type=jnp.float32) + b1_ref[...]
    feat = jnp.maximum(h, 0.2 * h)                                   # LeakyReLU(0.2)
    feat_ref[...] = feat.astype(feat_ref.dtype)

    # Head Linear(768,7) on a zero-padded [768,128] bf16 weight slab.
    # Padded bias lanes hold -1e30 so padded logits are huge-negative -> free mask.
    logits = jnp.dot(feat.astype(jnp.bfloat16), w2_ref[...],
                     preferred_element_type=jnp.float32) + b2_ref[...]
    logit_ref[...] = logits

    # Softmax over the lane axis; padded lanes underflow to exactly 0 after exp.
    m = jnp.max(logits, axis=-1, keepdims=True)
    e = jnp.exp(logits - m)
    denom = jnp.sum(e, axis=-1, keepdims=True)
    # Exact reciprocal on the [TM, 1] denominator (approx EUP reciprocal drifted
    # the row-sums past 1e-3), then a broadcast multiply.
    prob_ref[...] = e * (1.0 / denom)


def prepare_discriminator_params(w1, b1, w2, b2):
    """One-time parameter preparation (casting + head padding). Do NOT call per step."""
    w1_bf = w1.astype(jnp.bfloat16)                                   # [768, 768] bf16
    b1_2d = b1.reshape(1, HID_DIM).astype(jnp.float32)                # [1, 768]  f32
    w2_pad = jnp.zeros((HID_DIM, PAD_CLASSES), jnp.bfloat16)
    w2_pad = w2_pad.at[:, :NUM_CLASSES].set(w2.astype(jnp.bfloat16))  # [768, 128] bf16
    b2_pad = jnp.full((1, PAD_CLASSES), NEG_BIG, jnp.float32)
    b2_pad = b2_pad.at[0, :NUM_CLASSES].set(b2.astype(jnp.float32))   # [1, 128]  f32
    return w1_bf, b1_2d, w2_pad, b2_pad


@functools.partial(jax.jit)
def discriminator_forward(x, w1_bf, b1_2d, w2_pad, b2_pad):
    """x: [B, 768]. Returns (features [B,768] f32, logits [B,7] f32, probs [B,7] f32)."""
    B = x.shape[0]

    # Batch tiling: tile of up to 256 rows; weights stay VMEM-resident across the grid.
    TM = min(256, ((B + 7) // 8) * 8)
    B_pad = ((B + TM - 1) // TM) * TM

    xp = x.astype(jnp.bfloat16)
    if B_pad != B:
        xp = jnp.pad(xp, ((0, B_pad - B), (0, 0)))

    out_shapes = (
        jax.ShapeDtypeStruct((B_pad, HID_DIM), jnp.float32),      # features
        jax.ShapeDtypeStruct((B_pad, PAD_CLASSES), jnp.float32),  # padded logits
        jax.ShapeDtypeStruct((B_pad, PAD_CLASSES), jnp.float32),  # padded probs
    )

    feat, logits_pad, probs_pad = pl.pallas_call(
        _disc_kernel,
        out_shape=out_shapes,
        grid=(B_pad // TM,),
        in_specs=[
            pl.BlockSpec((TM, IN_DIM), lambda i: (i, 0)),            # x tiles over batch
            pl.BlockSpec((IN_DIM, HID_DIM), lambda i: (0, 0)),       # w1 resident
            pl.BlockSpec((1, HID_DIM), lambda i: (0, 0)),            # b1 resident
            pl.BlockSpec((HID_DIM, PAD_CLASSES), lambda i: (0, 0)),  # w2 resident
            pl.BlockSpec((1, PAD_CLASSES), lambda i: (0, 0)),        # b2 resident
        ],
        out_specs=[
            pl.BlockSpec((TM, HID_DIM), lambda i: (i, 0)),
            pl.BlockSpec((TM, PAD_CLASSES), lambda i: (i, 0)),
            pl.BlockSpec((TM, PAD_CLASSES), lambda i: (i, 0)),
        ],
        compiler_params=pltpu.CompilerParams(
            dimension_semantics=("parallel",)),
    )(xp, w1_bf, b1_2d, w2_pad, b2_pad)

    return (feat[:B],
            logits_pad[:B, :NUM_CLASSES],
            probs_pad[:B, :NUM_CLASSES])


def _reference(x, w1, b1, w2, b2):
    h = x @ w1 + b1
    feat = jnp.where(h > 0, h, 0.2 * h)
    logits = feat @ w2 + b2
    probs = jax.nn.softmax(logits, axis=-1)
    return feat, logits, probs


if __name__ == "__main__":
    key = jax.random.PRNGKey(0)
    kx, k1, k2, k3, k4 = jax.random.split(key, 5)

    B = 8  # small batch, consistent with x: [B, 768]
    x = jax.random.normal(kx, (B, IN_DIM), jnp.float32)

    # Deterministic synthetic parameters (Linear(768,768) and Linear(768,7)).
    bound1 = 1.0 / (IN_DIM ** 0.5)
    w1 = jax.random.uniform(k1, (IN_DIM, HID_DIM), jnp.float32, -bound1, bound1)
    b1 = jax.random.uniform(k2, (HID_DIM,), jnp.float32, -bound1, bound1)
    bound2 = 1.0 / (HID_DIM ** 0.5)
    w2 = jax.random.uniform(k3, (HID_DIM, NUM_CLASSES), jnp.float32, -bound2, bound2)
    b2 = jax.random.uniform(k4, (NUM_CLASSES,), jnp.float32, -bound2, bound2)

    # Prepare (pad + cast) parameters once, outside the per-call hot path.
    params = prepare_discriminator_params(w1, b1, w2, b2)

    feat, logits, probs = discriminator_forward(x, *params)
    jax.block_until_ready((feat, logits, probs))

    # Sanity check against plain-JAX f32 reference (bf16 matmul operands =>
    # looser tolerances than the pure-f32 version).
    rf, rl, rp = _reference(x, w1, b1, w2, b2)
    assert feat.shape == (B, HID_DIM)
    assert logits.shape == (B, NUM_CLASSES)
    assert probs.shape == (B, NUM_CLASSES)
    assert jnp.allclose(feat, rf, atol=5e-2, rtol=5e-2)
    assert jnp.allclose(logits, rl, atol=5e-2, rtol=5e-2)
    assert jnp.allclose(probs, rp, atol=2e-2)
    assert jnp.allclose(jnp.sum(probs, axis=-1), 1.0, atol=1e-3)

    print("KERNEL_OK")
</pallas_src>

<mosaic_0001>
module attributes {stable_mosaic.version = 11 : i64} {
  func.func @_disc_kernel(%arg0: i32, %arg1: memref<8x768xbf16, #tpu.memory_space<vmem>>, %arg2: memref<768x768xbf16, #tpu.memory_space<vmem>>, %arg3: memref<1x768xf32, #tpu.memory_space<vmem>>, %arg4: memref<768x128xbf16, #tpu.memory_space<vmem>>, %arg5: memref<1x128xf32, #tpu.memory_space<vmem>>, %arg6: memref<8x768xf32, #tpu.memory_space<vmem>>, %arg7: memref<8x128xf32, #tpu.memory_space<vmem>>, %arg8: memref<8x128xf32, #tpu.memory_space<vmem>>) attributes {dimension_semantics = [#tpu.dimension_semantics<parallel>], iteration_bounds = array<i64: 1>, scalar_prefetch = 0 : i64, scratch_operands = 0 : i64, tpu.core_type = #tpu.core_type<tc>, window_params = [{transform_indices = @transform_0, window_bounds = array<i64: 8, 768>}, {pipeline_mode = #tpu.pipeline_mode<synchronous>, transform_indices = @transform_1, window_bounds = array<i64: 768, 768>}, {pipeline_mode = #tpu.pipeline_mode<synchronous>, transform_indices = @transform_2, window_bounds = array<i64: 1, 768>}, {pipeline_mode = #tpu.pipeline_mode<synchronous>, transform_indices = @transform_3, window_bounds = array<i64: 768, 128>}, {pipeline_mode = #tpu.pipeline_mode<synchronous>, transform_indices = @transform_4, window_bounds = array<i64: 1, 128>}, {transform_indices = @transform_5, window_bounds = array<i64: 8, 768>}, {transform_indices = @transform_6, window_bounds = array<i64: 8, 128>}, {transform_indices = @transform_7, window_bounds = array<i64: 8, 128>}]} {
    %c0 = arith.constant 0 : index
    %c0_0 = arith.constant 0 : index
    %0 = vector.load %arg1[%c0, %c0_0] : memref<8x768xbf16, #tpu.memory_space<vmem>>, vector<8x768xbf16>
    %c0_1 = arith.constant 0 : index
    %c0_2 = arith.constant 0 : index
    %1 = vector.load %arg2[%c0_1, %c0_2] : memref<768x768xbf16, #tpu.memory_space<vmem>>, vector<768x768xbf16>
    %cst = arith.constant dense<0.000000e+00> : vector<8x768xf32>
    %2 = tpu.matmul %0, %1, %cst {dimension_numbers = #tpu.dot_dimension_numbers<[1], [0], [0], [1], [0, 0, 1, 1], [], []>} : vector<8x768xbf16>, vector<768x768xbf16>, vector<8x768xf32> -> vector<8x768xf32>
    %c0_3 = arith.constant 0 : index
    %c0_4 = arith.constant 0 : index
    %3 = vector.load %arg3[%c0_3, %c0_4] : memref<1x768xf32, #tpu.memory_space<vmem>>, vector<1x768xf32>
    %4 = vector.broadcast %3 : vector<1x768xf32> to vector<8x768xf32>
    %5 = arith.addf %2, %4 : vector<8x768xf32>
    %cst_5 = arith.constant 2.000000e-01 : f32
    %6 = vector.broadcast %cst_5 : f32 to vector<8x768xf32>
    %7 = arith.mulf %6, %5 : vector<8x768xf32>
    %8 = arith.maximumf %5, %7 : vector<8x768xf32>
    %c0_6 = arith.constant 0 : index
    %c0_7 = arith.constant 0 : index
    %9 = vector.load %arg6[%c0_6, %c0_7] : memref<8x768xf32, #tpu.memory_space<vmem>>, vector<8x768xf32>
    tpu.vector_store %arg6[%c0_6, %c0_7], %8 {strides = array<i32>} : memref<8x768xf32, #tpu.memory_space<vmem>>, vector<8x768xf32>,
    %10 = arith.truncf %8 : vector<8x768xf32> to vector<8x768xbf16>
    %c0_8 = arith.constant 0 : index
    %c0_9 = arith.constant 0 : index
    %11 = vector.load %arg4[%c0_8, %c0_9] : memref<768x128xbf16, #tpu.memory_space<vmem>>, vector<768x128xbf16>
    %cst_10 = arith.constant dense<0.000000e+00> : vector<8x128xf32>
    %12 = tpu.matmul %10, %11, %cst_10 {dimension_numbers = #tpu.dot_dimension_numbers<[1], [0], [0], [1], [0, 0, 1, 1], [], []>} : vector<8x768xbf16>, vector<768x128xbf16>, vector<8x128xf32> -> vector<8x128xf32>
    %c0_11 = arith.constant 0 : index
    %c0_12 = arith.constant 0 : index
    %13 = vector.load %arg5[%c0_11, %c0_12] : memref<1x128xf32, #tpu.memory_space<vmem>>, vector<1x128xf32>
    %14 = vector.broadcast %13 : vector<1x128xf32> to vector<8x128xf32>
    %15 = arith.addf %12, %14 : vector<8x128xf32>
    %c0_13 = arith.constant 0 : index
    %c0_14 = arith.constant 0 : index
    %16 = vector.load %arg7[%c0_13, %c0_14] : memref<8x128xf32, #tpu.memory_space<vmem>>, vector<8x128xf32>
    tpu.vector_store %arg7[%c0_13, %c0_14], %15 {strides = array<i32>} : memref<8x128xf32, #tpu.memory_space<vmem>>, vector<8x128xf32>,
    %cst_15 = arith.constant dense<0xFF800000> : vector<8xf32>
    %17 = vector.multi_reduction <maximumf>, %15, %cst_15 [1] : vector<8x128xf32> to vector<8xf32>
    %18 = vector.shape_cast %17 : vector<8xf32> to vector<8x1xf32>
    %19 = vector.broadcast %18 : vector<8x1xf32> to vector<8x128xf32>
    %20 = arith.subf %15, %19 : vector<8x128xf32>
    %21 = math.exp %20 : vector<8x128xf32>
    %cst_16 = arith.constant dense<0.000000e+00> : vector<8xf32>
    %22 = vector.multi_reduction <add>, %21, %cst_16 [1] : vector<8x128xf32> to vector<8xf32>
    %23 = vector.shape_cast %22 : vector<8xf32> to vector<8x1xf32>
    %cst_17 = arith.constant 1.000000e+00 : f32
    %24 = vector.broadcast %cst_17 : f32 to vector<8x1xf32>
    %25 = arith.divf %24, %23 : vector<8x1xf32>
    %26 = vector.broadcast %25 : vector<8x1xf32> to vector<8x128xf32>
    %27 = arith.mulf %21, %26 : vector<8x128xf32>
    %c0_18 = arith.constant 0 : index
    %c0_19 = arith.constant 0 : index
    %28 = vector.load %arg8[%c0_18, %c0_19] : memref<8x128xf32, #tpu.memory_space<vmem>>, vector<8x128xf32>
    tpu.vector_store %arg8[%c0_18, %c0_19], %27 {strides = array<i32>} : memref<8x128xf32, #tpu.memory_space<vmem>>, vector<8x128xf32>,
    return
  }
  func.func @transform_0(%arg0: i32) -> (i32, i32) {
    %c0_i32 = arith.constant 0 : i32
    %c0_i32_0 = arith.constant 0 : i32
    return %arg0, %c0_i32 : i32, i32
  }
  func.func @transform_1(%arg0: i32) -> (i32, i32) {
    %c0_i32 = arith.constant 0 : i32
    %c0_i32_0 = arith.constant 0 : i32
    %c0_i32_1 = arith.constant 0 : i32
    return %c0_i32, %c0_i32_0 : i32, i32
  }
  func.func @transform_2(%arg0: i32) -> (i32, i32) {
    %c0_i32 = arith.constant 0 : i32
    %c0_i32_0 = arith.constant 0 : i32
    %c0_i32_1 = arith.constant 0 : i32
    return %c0_i32, %c0_i32_0 : i32, i32
  }
  func.func @transform_3(%arg0: i32) -> (i32, i32) {
    %c0_i32 = arith.constant 0 : i32
    %c0_i32_0 = arith.constant 0 : i32
    %c0_i32_1 = arith.constant 0 : i32
    return %c0_i32, %c0_i32_0 : i32, i32
  }
  func.func @transform_4(%arg0: i32) -> (i32, i32) {
    %c0_i32 = arith.constant 0 : i32
    %c0_i32_0 = arith.constant 0 : i32
    %c0_i32_1 = arith.constant 0 : i32
    return %c0_i32, %c0_i32_0 : i32, i32
  }
  func.func @transform_5(%arg0: i32) -> (i32, i32) {
    %c0_i32 = arith.constant 0 : i32
    %c0_i32_0 = arith.constant 0 : i32
    return %arg0, %c0_i32 : i32, i32
  }
  func.func @transform_6(%arg0: i32) -> (i32, i32) {
    %c0_i32 = arith.constant 0 : i32
    %c0_i32_0 = arith.constant 0 : i32
    return %arg0, %c0_i32 : i32, i32
  }
  func.func @transform_7(%arg0: i32) -> (i32, i32) {
    %c0_i32 = arith.constant 0 : i32
    %c0_i32_0 = arith.constant 0 : i32
    return %arg0, %c0_i32 : i32, i32
  }
}

</mosaic_0001>

<llo_original>
// kernel: discriminator_forward.1
$region0: #{discriminator_forward.1}
  #allocation0 [shape = 'u32[]', space=smem, size = 0x4, offset = 0x4, fixed_abs, tag = 'smem constant byte address 0x4 - core index']
  #allocation1 [shape = 'u32[144,128]{1,0:T(1,128)}', space=vmem, size = 0x12000, scoped, tag = 'internal scratch']
  %s0 = inlined_call_operand.vmem [shape: bf16[8,768], index: 0, kind: input, shape index: {}]
  %s1 = inlined_call_operand.hbm [shape: bf16[768,768], index: 1, kind: input, shape index: {}]
  %s2 = inlined_call_operand.hbm [shape: f32[1,768], index: 2, kind: input, shape index: {}]
  %s3 = inlined_call_operand.hbm [shape: bf16[768,128], index: 3, kind: input, shape index: {}]
  %s4 = inlined_call_operand.hbm [shape: f32[1,128], index: 4, kind: input, shape index: {}]
  %s5 = inlined_call_operand.hbm [shape: f32[8,768], index: 5, kind: output, shape index: {0}]
  %s6 = inlined_call_operand.hbm [shape: f32[8,128], index: 6, kind: output, shape index: {1}]
  %s7 = inlined_call_operand.hbm [shape: f32[8,128], index: 7, kind: output, shape index: {2}]
  %8 = xla_tuple %s5, %s6, %s7
  %s9 = sld [smem:[#allocation0]]
  $region62: #{discriminator_forward.1} parent=0
    _
  %s11 = ssub.s32 1, %s9
  %s12 = scalar_select 0, %s11, %s9
  $region1: #{discriminator_forward.1} parent=0
    #allocation2 [shape = 'u8[1179648]{0}', space=vmem, size = 0x120000, scoped, tag = 'input window, operand 1, single buffered']
    #allocation3 [shape = 's32[1]{0}', space=sflag, size = 0x4, scoped, tag = 'scoped memory for discriminator_forward.1']
    #allocation4 [shape = 's32[1]{0}', space=sflag, size = 0x4, scoped, tag = 'scoped memory for discriminator_forward.1']
    #allocation5 [shape = 'u8[3072]{0}', space=vmem, size = 0xc00, scoped, tag = 'input window, operand 2, single buffered']
    #allocation6 [shape = 's32[1]{0}', space=sflag, size = 0x4, scoped, tag = 'scoped memory for discriminator_forward.1']
    #allocation7 [shape = 'u8[196608]{0}', space=vmem, size = 0x30000, scoped, tag = 'input window, operand 3, single buffered']
    #allocation8 [shape = 'u8[512]{0}', space=vmem, size = 0x400, scoped, tag = 'input window, operand 4, single buffered']
    #allocation9 [shape = 's32[1]{0}', space=sflag, size = 0x4, scoped, tag = 'scoped memory for discriminator_forward.1']
    #allocation10 [shape = 'u8[24576]{0}', space=vmem, size = 0x6000, scoped, tag = 'output window, operand 0, single buffered']
    #allocation11 [shape = 'u8[4096]{0}', space=vmem, size = 0x1000, scoped, tag = 'output window, operand 1, single buffered']
    #allocation12 [shape = 's32[1]{0}', space=sflag, size = 0x4, scoped, tag = 'scoped memory for discriminator_forward.1']
    #allocation13 [shape = 'u8[4096]{0}', space=vmem, size = 0x1000, scoped, tag = 'output window, operand 2, single buffered']
    %13 = vsyncpa [#allocation3], 0
    %14 = vsyncpa [#allocation6], 0
    %15 = vsyncpa [#allocation9], 0
    %16 = vsyncpa [#allocation4], 0
    %17 = vsyncpa [#allocation12], 0
    // Predicated region
    $region2: #{discriminator_forward.1} parent=1 // pred_check
      _
    $region3: #{discriminator_forward.1} parent=1 // pred_check_branch
      %19 = sbr.rel (0) target = $region5
    $region4: #{discriminator_forward.1} parent=1 // pred_region
      _
    $region5: #{discriminator_forward.1} parent=1 // pred_fallthru
      _
    // Predicated region
    $region6: #{discriminator_forward.1} parent=1 // pred_check
      _
    $region7: #{discriminator_forward.1} parent=1 // pred_check_branch
      %21 = sbr.rel (0) target = $region9
    $region8: #{discriminator_forward.1} parent=1 // pred_region
      %s23 = ssub.s32 36864, 36864
      %24 = vsyncadd [#allocation3], %s23
      %s25 = sshll.u32 [#allocation2], 4
      %s26 = int_to_ptr.vmem [resolvable:$true] %s25
      %31 = dma.hbm_to_vmem [thread:$0]  %s1, 36864, %s26, [#allocation3], 384, 384, 24
    $region9: #{discriminator_forward.1} parent=1 // pred_fallthru
      _
    // Predicated region
    $region10: #{discriminator_forward.1} parent=1 // pred_check
      _
    $region11: #{discriminator_forward.1} parent=1 // pred_check_branch
      %33 = sbr.rel (0) target = $region13
    $region12: #{discriminator_forward.1} parent=1 // pred_region
      %s35 = ssub.s32 96, 96
      %36 = vsyncadd [#allocation6], %s35
      %s38 = sshll.u32 [#allocation5], 4
      %s39 = int_to_ptr.vmem [resolvable:$true] %s38
      %41 = dma.hbm_to_vmem [thread:$0]  %s2, 96, %s39, [#allocation6]
    $region13: #{discriminator_forward.1} parent=1 // pred_fallthru
      _
    // Predicated region
    $region14: #{discriminator_forward.1} parent=1 // pred_check
      _
    $region15: #{discriminator_forward.1} parent=1 // pred_check_branch
      %43 = sbr.rel (0) target = $region17
    $region16: #{discriminator_forward.1} parent=1 // pred_region
      %s45 = ssub.s32 6144, 6144
      %46 = vsyncadd [#allocation6], %s45
      %s47 = sshll.u32 [#allocation7], 4
      %s48 = int_to_ptr.vmem [resolvable:$true] %s47
      %53 = dma.hbm_to_vmem [thread:$0]  %s3, 6144, %s48, [#allocation6], 64, 64, 4
    $region17: #{discriminator_forward.1} parent=1 // pred_fallthru
      _
    // Predicated region
    $region18: #{discriminator_forward.1} parent=1 // pred_check
      _
    $region19: #{discriminator_forward.1} parent=1 // pred_check_branch
      %55 = sbr.rel (0) target = $region21
    $region20: #{discriminator_forward.1} parent=1 // pred_region
      %s57 = ssub.s32 16, 16
      %58 = vsyncadd [#allocation9], %s57
      %s60 = sshll.u32 [#allocation8], 4
      %s61 = int_to_ptr.vmem [resolvable:$true] %s60
      %63 = dma.hbm_to_vmem [thread:$0]  %s4, 16, %s61, [#allocation9]
    $region21: #{discriminator_forward.1} parent=1 // pred_fallthru
      _
    // Predicated region
    $region22: #{discriminator_forward.1} parent=1 // pred_check
      _
    $region23: #{discriminator_forward.1} parent=1 // pred_check_branch
      %65 = sbr.rel (0) target = $region25
    $region24: #{discriminator_forward.1} parent=1 // pred_region
      %66 = dma.done [#allocation3], 36864
    $region25: #{discriminator_forward.1} parent=1 // pred_fallthru
      _
    // Predicated region
    $region26: #{discriminator_forward.1} parent=1 // pred_check
      _
    $region27: #{discriminator_forward.1} parent=1 // pred_check_branch
      %68 = sbr.rel (0) target = $region29
    $region28: #{discriminator_forward.1} parent=1 // pred_region
      %69 = dma.done [#allocation6], 96
    $region29: #{discriminator_forward.1} parent=1 // pred_fallthru
      _
    // Predicated region
    $region30: #{discriminator_forward.1} parent=1 // pred_check
      _
    $region31: #{discriminator_forward.1} parent=1 // pred_check_branch
      %71 = sbr.rel (0) target = $region33
    $region32: #{discriminator_forward.1} parent=1 // pred_region
      %72 = dma.done [#allocation6], 6144
    $region33: #{discriminator_forward.1} parent=1 // pred_fallthru
      _
    // Predicated region
    $region34: #{discriminator_forward.1} parent=1 // pred_check
      _
    $region35: #{discriminator_forward.1} parent=1 // pred_check_branch
      %74 = sbr.rel (0) target = $region37
    $region36: #{discriminator_forward.1} parent=1 // pred_region
      %75 = dma.done [#allocation9], 16
    $region37: #{discriminator_forward.1} parent=1 // pred_fallthru
      _
    %v77 = vld [vmem:[%s0] sm:$0xff]
    %v78 = vld [vmem:[%s0 + $0x8] sm:$0xff]
    %v79 = vld [vmem:[%s0 + $0x10] sm:$0xff]
    %v80 = vld [vmem:[#allocation2] sm:$0xff]
    %v81 = vld [vmem:[#allocation2 + $0x8] sm:$0xff]
    %v82 = vld [vmem:[#allocation2 + $0x10] sm:$0xff]
    %v83 = vld [vmem:[#allocation2 + $0x18] sm:$0xff]
    %v84 = vld [vmem:[#allocation2 + $0x20] sm:$0xff]
    %v85 = vld [vmem:[#allocation2 + $0x28] sm:$0xff]
    %v86 = vld [vmem:[#allocation2 + $0x30] sm:$0xff]
    %v87 = vld [vmem:[#allocation2 + $0x38] sm:$0xff]
    %v88 = vld [vmem:[#allocation2 + $0x40] sm:$0xff]
    %v89 = vld [vmem:[#allocation2 + $0x48] sm:$0xff]
    %v90 = vld [vmem:[#allocation2 + $0x50] sm:$0xff]
    %v91 = vld [vmem:[#allocation2 + $0x58] sm:$0xff]
    %v92 = vld [vmem:[#allocation2 + $0x60] sm:$0xff]
    %v93 = vld [vmem:[#allocation2 + $0x68] sm:$0xff]
    %v94 = vld [vmem:[#allocation2 + $0x70] sm:$0xff]
    %v95 = vld [vmem:[#allocation2 + $0x78] sm:$0xff]
    %v96 = vld [vmem:[#allocation2 + $0x80] sm:$0xff]
    %v97 = vld [vmem:[#allocation2 + $0x88] sm:$0xff]
    %v98 = vld [vmem:[#allocation2 + $0x90] sm:$0xff]
    %v99 = vld [vmem:[#allocation2 + $0x98] sm:$0xff]
    %v100 = vld [vmem:[#allocation2 + $0xa0] sm:$0xff]
    %v101 = vld [vmem:[#allocation2 + $0xa8] sm:$0xff]
    %v102 = vld [vmem:[#allocation2 + $0xb0] sm:$0xff]
    %v103 = vld [vmem:[#allocation2 + $0xb8] sm:$0xff]
    %v104 = vld [vmem:[#allocation2 + $0xc0] sm:$0xff]
    %v105 = vld [vmem:[#allocation2 + $0xc8] sm:$0xff]
    %v106 = vld [vmem:[#allocation2 + $0xd0] sm:$0xff]
    %v107 = vld [vmem:[#allocation2 + $0xd8] sm:$0xff]
    %v108 = vld [vmem:[#allocation2 + $0xe0] sm:$0xff]
    %v109 = vld [vmem:[#allocation2 + $0xe8] sm:$0xff]
    %v110 = vld [vmem:[#allocation2 + $0xf0] sm:$0xff]
    %v111 = vld [vmem:[#allocation2 + $0xf8] sm:$0xff]
    %v112 = vld [vmem:[#allocation2 + $0x100] sm:$0xff]
    %v113 = vld [vmem:[#allocation2 + $0x108] sm:$0xff]
    %v114 = vld [vmem:[#allocation2 + $0x110] sm:$0xff]
    %v115 = vld [vmem:[#allocation2 + $0x118] sm:$0xff]
    %v116 = vld [vmem:[#allocation2 + $0x120] sm:$0xff]
    %v117 = vld [vmem:[#allocation2 + $0x128] sm:$0xff]
    %v118 = vld [vmem:[#allocation2 + $0x130] sm:$0xff]
    %v119 = vld [vmem:[#allocation2 + $0x138] sm:$0xff]
    %v120 = vld [vmem:[#allocation2 + $0x140] sm:$0xff]
    %v121 = vld [vmem:[#allocation2 + $0x148] sm:$0xff]
    %v122 = vld [vmem:[#allocation2 + $0x150] sm:$0xff]
    %v123 = vld [vmem:[#allocation2 + $0x158] sm:$0xff]
    %v124 = vld [vmem:[#allocation2 + $0x160] sm:$0xff]
    %v125 = vld [vmem:[#allocation2 + $0x168] sm:$0xff]
    %v126 = vld [vmem:[#allocation2 + $0x170] sm:$0xff]
    %v127 = vld [vmem:[#allocation2 + $0x178] sm:$0xff]
    %v128 = vld [vmem:[#allocation2 + $0x180] sm:$0xff]
    %v129 = vld [vmem:[#allocation2 + $0x188] sm:$0xff]
    %v130 = vld [vmem:[#allocation2 + $0x190] sm:$0xff]
    %v131 = vld [vmem:[#allocation2 + $0x198] sm:$0xff]
    %v132 = vld [vmem:[#allocation2 + $0x1a0] sm:$0xff]
    %v133 = vld [vmem:[#allocation2 + $0x1a8] sm:$0xff]
    %v134 = vld [vmem:[#allocation2 + $0x1b0] sm:$0xff]
    %v135 = vld [vmem:[#allocation2 + $0x1b8] sm:$0xff]
    %v136 = vld [vmem:[#allocation2 + $0x1c0] sm:$0xff]
    %v137 = vld [vmem:[#allocation2 + $0x1c8] sm:$0xff]
    %v138 = vld [vmem:[#allocation2 + $0x1d0] sm:$0xff]
    %v139 = vld [vmem:[#allocation2 + $0x1d8] sm:$0xff]
    %v140 = vld [vmem:[#allocation2 + $0x1e0] sm:$0xff]
    %v141 = vld [vmem:[#allocation2 + $0x1e8] sm:$0xff]
    %v142 = vld [vmem:[#allocation2 + $0x1f0] sm:$0xff]
    %v143 = vld [vmem:[#allocation2 + $0x1f8] sm:$0xff]
    %v144 = vld [vmem:[#allocation2 + $0x200] sm:$0xff]
    %v145 = vld [vmem:[#allocation2 + $0x208] sm:$0xff]
    %v146 = vld [vmem:[#allocation2 + $0x210] sm:$0xff]
    %v147 = vld [vmem:[#allocation2 + $0x218] sm:$0xff]
    %v148 = vld [vmem:[#allocation2 + $0x220] sm:$0xff]
    %v149 = vld [vmem:[#allocation2 + $0x228] sm:$0xff]
    %v150 = vld [vmem:[#allocation2 + $0x230] sm:$0xff]
    %v151 = vld [vmem:[#allocation2 + $0x238] sm:$0xff]
    %v152 = vld [vmem:[#allocation2 + $0x240] sm:$0xff]
    %v153 = vld [vmem:[#allocation2 + $0x248] sm:$0xff]
    %v154 = vld [vmem:[#allocation2 + $0x250] sm:$0xff]
    %v155 = vld [vmem:[#allocation2 + $0x258] sm:$0xff]
    %v156 = vld [vmem:[#allocation2 + $0x260] sm:$0xff]
    %v157 = vld [vmem:[#allocation2 + $0x268] sm:$0xff]
    %v158 = vld [vmem:[#allocation2 + $0x270] sm:$0xff]
    %v159 = vld [vmem:[#allocation2 + $0x278] sm:$0xff]
    %v160 = vld [vmem:[#allocation2 + $0x280] sm:$0xff]
    %v161 = vld [vmem:[#allocation2 + $0x288] sm:$0xff]
    %v162 = vld [vmem:[#allocation2 + $0x290] sm:$0xff]
    %v163 = vld [vmem:[#allocation2 + $0x298] sm:$0xff]
    %v164 = vld [vmem:[#allocation2 + $0x2a0] sm:$0xff]
    %v165 = vld [vmem:[#allocation2 + $0x2a8] sm:$0xff]
    %v166 = vld [vmem:[#allocation2 + $0x2b0] sm:$0xff]
    %v167 = vld [vmem:[#allocation2 + $0x2b8] sm:$0xff]
    %v168 = vld [vmem:[#allocation2 + $0x2c0] sm:$0xff]
    %v169 = vld [vmem:[#allocation2 + $0x2c8] sm:$0xff]
    %v170 = vld [vmem:[#allocation2 + $0x2d0] sm:$0xff]
    %v171 = vld [vmem:[#allocation2 + $0x2d8] sm:$0xff]
    %v172 = vld [vmem:[#allocation2 + $0x2e0] sm:$0xff]
    %v173 = vld [vmem:[#allocation2 + $0x2e8] sm:$0xff]
    %v174 = vld [vmem:[#allocation2 + $0x2f0] sm:$0xff]
    %v175 = vld [vmem:[#allocation2 + $0x2f8] sm:$0xff]
    %v176 = vld [vmem:[#allocation2 + $0x300] sm:$0xff]
    %v177 = vld [vmem:[#allocation2 + $0x308] sm:$0xff]
    %v178 = vld [vmem:[#allocation2 + $0x310] sm:$0xff]
    %v179 = vld [vmem:[#allocation2 + $0x318] sm:$0xff]
    %v180 = vld [vmem:[#allocation2 + $0x320] sm:$0xff]
    %v181 = vld [vmem:[#allocation2 + $0x328] sm:$0xff]
    %v182 = vld [vmem:[#allocation2 + $0x330] sm:$0xff]
    %v183 = vld [vmem:[#allocation2 + $0x338] sm:$0xff]
    %v184 = vld [vmem:[#allocation2 + $0x340] sm:$0xff]
    %v185 = vld [vmem:[#allocation2 + $0x348] sm:$0xff]
    %v186 = vld [vmem:[#allocation2 + $0x350] sm:$0xff]
    %v187 = vld [vmem:[#allocation2 + $0x358] sm:$0xff]
    %v188 = vld [vmem:[#allocation2 + $0x360] sm:$0xff]
    %v189 = vld [vmem:[#allocation2 + $0x368] sm:$0xff]
    %v190 = vld [vmem:[#allocation2 + $0x370] sm:$0xff]
    %v191 = vld [vmem:[#allocation2 + $0x378] sm:$0xff]
    %v192 = vld [vmem:[#allocation2 + $0x380] sm:$0xff]
    %v193 = vld [vmem:[#allocation2 + $0x388] sm:$0xff]
    %v194 = vld [vmem:[#allocation2 + $0x390] sm:$0xff]
    %v195 = vld [vmem:[#allocation2 + $0x398] sm:$0xff]
    %v196 = vld [vmem:[#allocation2 + $0x3a0] sm:$0xff]
    %v197 = vld [vmem:[#allocation2 + $0x3a8] sm:$0xff]
    %v198 = vld [vmem:[#allocation2 + $0x3b0] sm:$0xff]
    %v199 = vld [vmem:[#allocation2 + $0x3b8] sm:$0xff]
    %v200 = vld [vmem:[#allocation2 + $0x3c0] sm:$0xff]
    %v201 = vld [vmem:[#allocation2 + $0x3c8] sm:$0xff]
    %v202 = vld [vmem:[#allocation2 + $0x3d0] sm:$0xff]
    %v203 = vld [vmem:[#allocation2 + $0x3d8] sm:$0xff]
    %v204 = vld [vmem:[#allocation2 + $0x3e0] sm:$0xff]
    %v205 = vld [vmem:[#allocation2 + $0x3e8] sm:$0xff]
    %v206 = vld [vmem:[#allocation2 + $0x3f0] sm:$0xff]
    %v207 = vld [vmem:[#allocation2 + $0x3f8] sm:$0xff]
    %v208 = vld [vmem:[#allocation2 + $0x400] sm:$0xff]
    %v209 = vld [vmem:[#allocation2 + $0x408] sm:$0xff]
    %v210 = vld [vmem:[#allocation2 + $0x410] sm:$0xff]
    %v211 = vld [vmem:[#allocation2 + $0x418] sm:$0xff]
    %v212 = vld [vmem:[#allocation2 + $0x420] sm:$0xff]
    %v213 = vld [vmem:[#allocation2 + $0x428] sm:$0xff]
    %v214 = vld [vmem:[#allocation2 + $0x430] sm:$0xff]
    %v215 = vld [vmem:[#allocation2 + $0x438] sm:$0xff]
    %v216 = vld [vmem:[#allocation2 + $0x440] sm:$0xff]
    %v217 = vld [vmem:[#allocation2 + $0x448] sm:$0xff]
    %v218 = vld [vmem:[#allocation2 + $0x450] sm:$0xff]
    %v219 = vld [vmem:[#allocation2 + $0x458] sm:$0xff]
    %v220 = vld [vmem:[#allocation2 + $0x460] sm:$0xff]
    %v221 = vld [vmem:[#allocation2 + $0x468] sm:$0xff]
    %v222 = vld [vmem:[#allocation2 + $0x470] sm:$0xff]
    %v223 = vld [vmem:[#allocation2 + $0x478] sm:$0xff]
    %v224 = vld [vmem:[#allocation2 + $0x480] sm:$0xff]
    %v225 = vld [vmem:[#allocation2 + $0x488] sm:$0xff]
    %v226 = vld [vmem:[#allocation2 + $0x490] sm:$0xff]
    %v227 = vld [vmem:[#allocation2 + $0x498] sm:$0xff]
    %v228 = vld [vmem:[#allocation2 + $0x4a0] sm:$0xff]
    %v229 = vld [vmem:[#allocation2 + $0x4a8] sm:$0xff]
    %v230 = vld [vmem:[#allocation2 + $0x4b0] sm:$0xff]
    %v231 = vld [vmem:[#allocation2 + $0x4b8] sm:$0xff]
    %v232 = vld [vmem:[#allocation2 + $0x4c0] sm:$0xff]
    %v233 = vld [vmem:[#allocation2 + $0x4c8] sm:$0xff]
    %v234 = vld [vmem:[#allocation2 + $0x4d0] sm:$0xff]
    %v235 = vld [vmem:[#allocation2 + $0x4d8] sm:$0xff]
    %v236 = vld [vmem:[#allocation2 + $0x4e0] sm:$0xff]
    %v237 = vld [vmem:[#allocation2 + $0x4e8] sm:$0xff]
    %v238 = vld [vmem:[#allocation2 + $0x4f0] sm:$0xff]
    %v239 = vld [vmem:[#allocation2 + $0x4f8] sm:$0xff]
    %v240 = vld [vmem:[#allocation2 + $0x500] sm:$0xff]
    %v241 = vld [vmem:[#allocation2 + $0x508] sm:$0xff]
    %v242 = vld [vmem:[#allocation2 + $0x510] sm:$0xff]
    %v243 = vld [vmem:[#allocation2 + $0x518] sm:$0xff]
    %v244 = vld [vmem:[#allocation2 + $0x520] sm:$0xff]
    %v245 = vld [vmem:[#allocation2 + $0x528] sm:$0xff]
    %v246 = vld [vmem:[#allocation2 + $0x530] sm:$0xff]
    %v247 = vld [vmem:[#allocation2 + $0x538] sm:$0xff]
    %v248 = vld [vmem:[#allocation2 + $0x540] sm:$0xff]
    %v249 = vld [vmem:[#allocation2 + $0x548] sm:$0xff]
    %v250 = vld [vmem:[#allocation2 + $0x550] sm:$0xff]
    %v251 = vld [vmem:[#allocation2 + $0x558] sm:$0xff]
    %v252 = vld [vmem:[#allocation2 + $0x560] sm:$0xff]
    %v253 = vld [vmem:[#allocation2 + $0x568] sm:$0xff]
    %v254 = vld [vmem:[#allocation2 + $0x570] sm:$0xff]
    %v255 = vld [vmem:[#allocation2 + $0x578] sm:$0xff]
    %v256 = vld [vmem:[#allocation2 + $0x580] sm:$0xff]
    %v257 = vld [vmem:[#allocation2 + $0x588] sm:$0xff]
    %v258 = vld [vmem:[#allocation2 + $0x590] sm:$0xff]
    %v259 = vld [vmem:[#allocation2 + $0x598] sm:$0xff]
    %v260 = vld [vmem:[#allocation2 + $0x5a0] sm:$0xff]
    %v261 = vld [vmem:[#allocation2 + $0x5a8] sm:$0xff]
    %v262 = vld [vmem:[#allocation2 + $0x5b0] sm:$0xff]
    %v263 = vld [vmem:[#allocation2 + $0x5b8] sm:$0xff]
    %v264 = vld [vmem:[#allocation2 + $0x5c0] sm:$0xff]
    %v265 = vld [vmem:[#allocation2 + $0x5c8] sm:$0xff]
    %v266 = vld [vmem:[#allocation2 + $0x5d0] sm:$0xff]
    %v267 = vld [vmem:[#allocation2 + $0x5d8] sm:$0xff]
    %v268 = vld [vmem:[#allocation2 + $0x5e0] sm:$0xff]
    %v269 = vld [vmem:[#allocation2 + $0x5e8] sm:$0xff]
    %v270 = vld [vmem:[#allocation2 + $0x5f0] sm:$0xff]
    %v271 = vld [vmem:[#allocation2 + $0x5f8] sm:$0xff]
    %v272 = vld [vmem:[#allocation2 + $0x600] sm:$0xff]
    %v273 = vld [vmem:[#allocation2 + $0x608] sm:$0xff]
    %v274 = vld [vmem:[#allocation2 + $0x610] sm:$0xff]
    %v275 = vld [vmem:[#allocation2 + $0x618] sm:$0xff]
    %v276 = vld [vmem:[#allocation2 + $0x620] sm:$0xff]
    %v277 = vld [vmem:[#allocation2 + $0x628] sm:$0xff]
    %v278 = vld [vmem:[#allocation2 + $0x630] sm:$0xff]
    %v279 = vld [vmem:[#allocation2 + $0x638] sm:$0xff]
    %v280 = vld [vmem:[#allocation2 + $0x640] sm:$0xff]
    %v281 = vld [vmem:[#allocation2 + $0x648] sm:$0xff]
    %v282 = vld [vmem:[#allocation2 + $0x650] sm:$0xff]
    %v283 = vld [vmem:[#allocation2 + $0x658] sm:$0xff]
    %v284 = vld [vmem:[#allocation2 + $0x660] sm:$0xff]
    %v285 = vld [vmem:[#allocation2 + $0x668] sm:$0xff]
    %v286 = vld [vmem:[#allocation2 + $0x670] sm:$0xff]
    %v287 = vld [vmem:[#allocation2 + $0x678] sm:$0xff]
    %v288 = vld [vmem:[#allocation2 + $0x680] sm:$0xff]
    %v289 = vld [vmem:[#allocation2 + $0x688] sm:$0xff]
    %v290 = vld [vmem:[#allocation2 + $0x690] sm:$0xff]
    %v291 = vld [vmem:[#allocation2 + $0x698] sm:$0xff]
    %v292 = vld [vmem:[#allocation2 + $0x6a0] sm:$0xff]
    %v293 = vld [vmem:[#allocation2 + $0x6a8] sm:$0xff]
    %v294 = vld [vmem:[#allocation2 + $0x6b0] sm:$0xff]
    %v295 = vld [vmem:[#allocation2 + $0x6b8] sm:$0xff]
    %v296 = vld [vmem:[#allocation2 + $0x6c0] sm:$0xff]
    %v297 = vld [vmem:[#allocation2 + $0x6c8] sm:$0xff]
    %v298 = vld [vmem:[#allocation2 + $0x6d0] sm:$0xff]
    %v299 = vld [vmem:[#allocation2 + $0x6d8] sm:$0xff]
    %v300 = vld [vmem:[#allocation2 + $0x6e0] sm:$0xff]
    %v301 = vld [vmem:[#allocation2 + $0x6e8] sm:$0xff]
    %v302 = vld [vmem:[#allocation2 + $0x6f0] sm:$0xff]
    %v303 = vld [vmem:[#allocation2 + $0x6f8] sm:$0xff]
    %v304 = vld [vmem:[#allocation2 + $0x700] sm:$0xff]
    %v305 = vld [vmem:[#allocation2 + $0x708] sm:$0xff]
    %v306 = vld [vmem:[#allocation2 + $0x710] sm:$0xff]
    %v307 = vld [vmem:[#allocation2 + $0x718] sm:$0xff]
    %v308 = vld [vmem:[#allocation2 + $0x720] sm:$0xff]
    %v309 = vld [vmem:[#allocation2 + $0x728] sm:$0xff]
    %v310 = vld [vmem:[#allocation2 + $0x730] sm:$0xff]
    %v311 = vld [vmem:[#allocation2 + $0x738] sm:$0xff]
    %v312 = vld [vmem:[#allocation2 + $0x740] sm:$0xff]
    %v313 = vld [vmem:[#allocation2 + $0x748] sm:$0xff]
    %v314 = vld [vmem:[#allocation2 + $0x750] sm:$0xff]
    %v315 = vld [vmem:[#allocation2 + $0x758] sm:$0xff]
    %v316 = vld [vmem:[#allocation2 + $0x760] sm:$0xff]
    %v317 = vld [vmem:[#allocation2 + $0x768] sm:$0xff]
    %v318 = vld [vmem:[#allocation2 + $0x770] sm:$0xff]
    %v319 = vld [vmem:[#allocation2 + $0x778] sm:$0xff]
    %v320 = vld [vmem:[#allocation2 + $0x780] sm:$0xff]
    %v321 = vld [vmem:[#allocation2 + $0x788] sm:$0xff]
    %v322 = vld [vmem:[#allocation2 + $0x790] sm:$0xff]
    %v323 = vld [vmem:[#allocation2 + $0x798] sm:$0xff]
    %v324 = vld [vmem:[#allocation2 + $0x7a0] sm:$0xff]
    %v325 = vld [vmem:[#allocation2 + $0x7a8] sm:$0xff]
    %v326 = vld [vmem:[#allocation2 + $0x7b0] sm:$0xff]
    %v327 = vld [vmem:[#allocation2 + $0x7b8] sm:$0xff]
    %v328 = vld [vmem:[#allocation2 + $0x7c0] sm:$0xff]
    %v329 = vld [vmem:[#allocation2 + $0x7c8] sm:$0xff]
    %v330 = vld [vmem:[#allocation2 + $0x7d0] sm:$0xff]
    %v331 = vld [vmem:[#allocation2 + $0x7d8] sm:$0xff]
    %v332 = vld [vmem:[#allocation2 + $0x7e0] sm:$0xff]
    %v333 = vld [vmem:[#allocation2 + $0x7e8] sm:$0xff]
    %v334 = vld [vmem:[#allocation2 + $0x7f0] sm:$0xff]
    %v335 = vld [vmem:[#allocation2 + $0x7f8] sm:$0xff]
    %v336 = vld [vmem:[#allocation2 + $0x800] sm:$0xff]
    %v337 = vld [vmem:[#allocation2 + $0x808] sm:$0xff]
    %v338 = vld [vmem:[#allocation2 + $0x810] sm:$0xff]
    %v339 = vld [vmem:[#allocation2 + $0x818] sm:$0xff]
    %v340 = vld [vmem:[#allocation2 + $0x820] sm:$0xff]
    %v341 = vld [vmem:[#allocation2 + $0x828] sm:$0xff]
    %v342 = vld [vmem:[#allocation2 + $0x830] sm:$0xff]
    %v343 = vld [vmem:[#allocation2 + $0x838] sm:$0xff]
    %v344 = vld [vmem:[#allocation2 + $0x840] sm:$0xff]
    %v345 = vld [vmem:[#allocation2 + $0x848] sm:$0xff]
    %v346 = vld [vmem:[#allocation2 + $0x850] sm:$0xff]
    %v347 = vld [vmem:[#allocation2 + $0x858] sm:$0xff]
    %v348 = vld [vmem:[#allocation2 + $0x860] sm:$0xff]
    %v349 = vld [vmem:[#allocation2 + $0x868] sm:$0xff]
    %v350 = vld [vmem:[#allocation2 + $0x870] sm:$0xff]
    %v351 = vld [vmem:[#allocation2 + $0x878] sm:$0xff]
    %v352 = vld [vmem:[#allocation2 + $0x880] sm:$0xff]
    %v353 = vld [vmem:[#allocation2 + $0x888] sm:$0xff]
    %v354 = vld [vmem:[#allocation2 + $0x890] sm:$0xff]
    %v355 = vld [vmem:[#allocation2 + $0x898] sm:$0xff]
    %v356 = vld [vmem:[#allocation2 + $0x8a0] sm:$0xff]
    %v357 = vld [vmem:[#allocation2 + $0x8a8] sm:$0xff]
    %v358 = vld [vmem:[#allocation2 + $0x8b0] sm:$0xff]
    %v359 = vld [vmem:[#allocation2 + $0x8b8] sm:$0xff]
    %v360 = vld [vmem:[#allocation2 + $0x8c0] sm:$0xff]
    %v361 = vld [vmem:[#allocation2 + $0x8c8] sm:$0xff]
    %v362 = vld [vmem:[#allocation2 + $0x8d0] sm:$0xff]
    %v363 = vld [vmem:[#allocation2 + $0x8d8] sm:$0xff]
    %v364 = vld [vmem:[#allocation2 + $0x8e0] sm:$0xff]
    %v365 = vld [vmem:[#allocation2 + $0x8e8] sm:$0xff]
    %v366 = vld [vmem:[#allocation2 + $0x8f0] sm:$0xff]
    %v367 = vld [vmem:[#allocation2 + $0x8f8] sm:$0xff]
    %v368 = vld [vmem:[#allocation5] sm:$0x3f]
    %v370 = vlaneseq
    %v371 = vshrl.u32 %v370, 7
    %v372 = vsub.s32 0, %v371
    %v373 = vrot.slane %v368, %v372
    %v374 = vlaneseq
    %v375 = vshrl.u32 %v374, 7
    %v376 = vsub.s32 1, %v375
    %v377 = vrot.slane %v368, %v376
    %v378 = vlaneseq
    %v379 = vshrl.u32 %v378, 7
    %v380 = vsub.s32 2, %v379
    %v381 = vrot.slane %v368, %v380
    %v382 = vlaneseq
    %v383 = vshrl.u32 %v382, 7
    %v384 = vsub.s32 3, %v383
    %v385 = vrot.slane %v368, %v384
    %v386 = vlaneseq
    %v387 = vshrl.u32 %v386, 7
    %v388 = vsub.s32 4, %v387
    %v389 = vrot.slane %v368, %v388
    %v390 = vlaneseq
    %v391 = vshrl.u32 %v390, 7
    %v392 = vsub.s32 5, %v391
    %v393 = vrot.slane %v368, %v392
    %v403 = vunpack.c.l.b16 %v77
    %v404 = vunpack.c.h.b16 %v77
    %v405 = vunpack.c.l.b16 %v78
    %v406 = vunpack.c.h.b16 %v78
    %v407 = vunpack.c.l.b16 %v79
    %v408 = vunpack.c.h.b16 %v79
    %v409 = vpack.c.b16 %v403, %v403
    %v410 = vpack.c.b16 %v404, %v404
    %v411 = vpack.c.b16 %v405, %v405
    %v412 = vpack.c.b16 %v406, %v406
    %v413 = vpack.c.b16 %v407, %v407
    %v414 = vpack.c.b16 %v408, %v408
    %v709 = vunpack.c.l.b16 %v80
    %v710 = vunpack.c.h.b16 %v80
    %v711 = vunpack.c.l.b16 %v81
    %v712 = vunpack.c.h.b16 %v81
    %v713 = vunpack.c.l.b16 %v82
    %v714 = vunpack.c.h.b16 %v82
    %v715 = vunpack.c.l.b16 %v83
    %v716 = vunpack.c.h.b16 %v83
    %v717 = vunpack.c.l.b16 %v84
    %v718 = vunpack.c.h.b16 %v84
    %v719 = vunpack.c.l.b16 %v85
    %v720 = vunpack.c.h.b16 %v85
    %v721 = vunpack.c.l.b16 %v86
    %v722 = vunpack.c.h.b16 %v86
    %v723 = vunpack.c.l.b16 %v87
    %v724 = vunpack.c.h.b16 %v87
    %v725 = vunpack.c.l.b16 %v88
    %v726 = vunpack.c.h.b16 %v88
    %v727 = vunpack.c.l.b16 %v89
    %v728 = vunpack.c.h.b16 %v89
    %v729 = vunpack.c.l.b16 %v90
    %v730 = vunpack.c.h.b16 %v90
    %v731 = vunpack.c.l.b16 %v91
    %v732 = vunpack.c.h.b16 %v91
    %v733 = vunpack.c.l.b16 %v92
    %v734 = vunpack.c.h.b16 %v92
    %v735 = vunpack.c.l.b16 %v93
    %v736 = vunpack.c.h.b16 %v93
    %v737 = vunpack.c.l.b16 %v94
    %v738 = vunpack.c.h.b16 %v94
    %v739 = vunpack.c.l.b16 %v95
    %v740 = vunpack.c.h.b16 %v95
    %v741 = vunpack.c.l.b16 %v96
    %v742 = vunpack.c.h.b16 %v96
    %v743 = vunpack.c.l.b16 %v97
    %v744 = vunpack.c.h.b16 %v97
    %v745 = vunpack.c.l.b16 %v98
    %v746 = vunpack.c.h.b16 %v98
    %v747 = vunpack.c.l.b16 %v99
    %v748 = vunpack.c.h.b16 %v99
    %v749 = vunpack.c.l.b16 %v100
    %v750 = vunpack.c.h.b16 %v100
    %v751 = vunpack.c.l.b16 %v101
    %v752 = vunpack.c.h.b16 %v101
    %v753 = vunpack.c.l.b16 %v102
    %v754 = vunpack.c.h.b16 %v102
    %v755 = vunpack.c.l.b16 %v103
    %v756 = vunpack.c.h.b16 %v103
    %v757 = vunpack.c.l.b16 %v104
    %v758 = vunpack.c.h.b16 %v104
    %v759 = vunpack.c.l.b16 %v105
    %v760 = vunpack.c.h.b16 %v105
    %v761 = vunpack.c.l.b16 %v106
    %v762 = vunpack.c.h.b16 %v106
    %v763 = vunpack.c.l.b16 %v107
    %v764 = vunpack.c.h.b16 %v107
    %v765 = vunpack.c.l.b16 %v108
    %v766 = vunpack.c.h.b16 %v108
    %v767 = vunpack.c.l.b16 %v109
    %v768 = vunpack.c.h.b16 %v109
    %v769 = vunpack.c.l.b16 %v110
    %v770 = vunpack.c.h.b16 %v110
    %v771 = vunpack.c.l.b16 %v111
    %v772 = vunpack.c.h.b16 %v111
    %v773 = vunpack.c.l.b16 %v112
    %v774 = vunpack.c.h.b16 %v112
    %v775 = vunpack.c.l.b16 %v113
    %v776 = vunpack.c.h.b16 %v113
    %v777 = vunpack.c.l.b16 %v114
    %v778 = vunpack.c.h.b16 %v114
    %v779 = vunpack.c.l.b16 %v115
    %v780 = vunpack.c.h.b16 %v115
    %v781 = vunpack.c.l.b16 %v116
    %v782 = vunpack.c.h.b16 %v116
    %v783 = vunpack.c.l.b16 %v117
    %v784 = vunpack.c.h.b16 %v117
    %v785 = vunpack.c.l.b16 %v118
    %v786 = vunpack.c.h.b16 %v118
    %v787 = vunpack.c.l.b16 %v119
    %v788 = vunpack.c.h.b16 %v119
    %v789 = vunpack.c.l.b16 %v120
    %v790 = vunpack.c.h.b16 %v120
    %v791 = vunpack.c.l.b16 %v121
    %v792 = vunpack.c.h.b16 %v121
    %v793 = vunpack.c.l.b16 %v122
    %v794 = vunpack.c.h.b16 %v122
    %v795 = vunpack.c.l.b16 %v123
    %v796 = vunpack.c.h.b16 %v123
    %v797 = vunpack.c.l.b16 %v124
    %v798 = vunpack.c.h.b16 %v124
    %v799 = vunpack.c.l.b16 %v125
    %v800 = vunpack.c.h.b16 %v125
    %v801 = vunpack.c.l.b16 %v126
    %v802 = vunpack.c.h.b16 %v126
    %v803 = vunpack.c.l.b16 %v127
    %v804 = vunpack.c.h.b16 %v127
    %v805 = vunpack.c.l.b16 %v128
    %v806 = vunpack.c.h.b16 %v128
    %v807 = vunpack.c.l.b16 %v129
    %v808 = vunpack.c.h.b16 %v129
    %v809 = vunpack.c.l.b16 %v130
    %v810 = vunpack.c.h.b16 %v130
    %v811 = vunpack.c.l.b16 %v131
    %v812 = vunpack.c.h.b16 %v131
    %v813 = vunpack.c.l.b16 %v132
    %v814 = vunpack.c.h.b16 %v132
    %v815 = vunpack.c.l.b16 %v133
    %v816 = vunpack.c.h.b16 %v133
    %v817 = vunpack.c.l.b16 %v134
    %v818 = vunpack.c.h.b16 %v134
    %v819 = vunpack.c.l.b16 %v135
    %v820 = vunpack.c.h.b16 %v135
    %v821 = vunpack.c.l.b16 %v136
    %v822 = vunpack.c.h.b16 %v136
    %v823 = vunpack.c.l.b16 %v137
    %v824 = vunpack.c.h.b16 %v137
    %v825 = vunpack.c.l.b16 %v138
    %v826 = vunpack.c.h.b16 %v138
    %v827 = vunpack.c.l.b16 %v139
    %v828 = vunpack.c.h.b16 %v139
    %v829 = vunpack.c.l.b16 %v140
    %v830 = vunpack.c.h.b16 %v140
    %v831 = vunpack.c.l.b16 %v141
    %v832 = vunpack.c.h.b16 %v141
    %v833 = vunpack.c.l.b16 %v142
    %v834 = vunpack.c.h.b16 %v142
    %v835 = vunpack.c.l.b16 %v143
    %v836 = vunpack.c.h.b16 %v143
    %v837 = vunpack.c.l.b16 %v144
    %v838 = vunpack.c.h.b16 %v144
    %v839 = vunpack.c.l.b16 %v145
    %v840 = vunpack.c.h.b16 %v145
    %v841 = vunpack.c.l.b16 %v146
    %v842 = vunpack.c.h.b16 %v146
    %v843 = vunpack.c.l.b16 %v147
    %v844 = vunpack.c.h.b16 %v147
    %v845 = vunpack.c.l.b16 %v148
    %v846 = vunpack.c.h.b16 %v148
    %v847 = vunpack.c.l.b16 %v149
    %v848 = vunpack.c.h.b16 %v149
    %v849 = vunpack.c.l.b16 %v150
    %v850 = vunpack.c.h.b16 %v150
    %v851 = vunpack.c.l.b16 %v151
    %v852 = vunpack.c.h.b16 %v151
    %v853 = vunpack.c.l.b16 %v152
    %v854 = vunpack.c.h.b16 %v152
    %v855 = vunpack.c.l.b16 %v153
    %v856 = vunpack.c.h.b16 %v153
    %v857 = vunpack.c.l.b16 %v154
    %v858 = vunpack.c.h.b16 %v154
    %v859 = vunpack.c.l.b16 %v155
    %v860 = vunpack.c.h.b16 %v155
    %v861 = vunpack.c.l.b16 %v156
    %v862 = vunpack.c.h.b16 %v156
    %v863 = vunpack.c.l.b16 %v157
    %v864 = vunpack.c.h.b16 %v157
    %v865 = vunpack.c.l.b16 %v158
    %v866 = vunpack.c.h.b16 %v158
    %v867 = vunpack.c.l.b16 %v159
    %v868 = vunpack.c.h.b16 %v159
    %v869 = vunpack.c.l.b16 %v160
    %v870 = vunpack.c.h.b16 %v160
    %v871 = vunpack.c.l.b16 %v161
    %v872 = vunpack.c.h.b16 %v161
    %v873 = vunpack.c.l.b16 %v162
    %v874 = vunpack.c.h.b16 %v162
    %v875 = vunpack.c.l.b16 %v163
    %v876 = vunpack.c.h.b16 %v163
    %v877 = vunpack.c.l.b16 %v164
    %v878 = vunpack.c.h.b16 %v164
    %v879 = vunpack.c.l.b16 %v165
    %v880 = vunpack.c.h.b16 %v165
    %v881 = vunpack.c.l.b16 %v166
    %v882 = vunpack.c.h.b16 %v166
    %v883 = vunpack.c.l.b16 %v167
    %v884 = vunpack.c.h.b16 %v167
    %v885 = vunpack.c.l.b16 %v168
    %v886 = vunpack.c.h.b16 %v168
    %v887 = vunpack.c.l.b16 %v169
    %v888 = vunpack.c.h.b16 %v169
    %v889 = vunpack.c.l.b16 %v170
    %v890 = vunpack.c.h.b16 %v170
    %v891 = vunpack.c.l.b16 %v171
    %v892 = vunpack.c.h.b16 %v171
    %v893 = vunpack.c.l.b16 %v172
    %v894 = vunpack.c.h.b16 %v172
    %v895 = vunpack.c.l.b16 %v173
    %v896 = vunpack.c.h.b16 %v173
    %v897 = vunpack.c.l.b16 %v174
    %v898 = vunpack.c.h.b16 %v174
    %v899 = vunpack.c.l.b16 %v175
    %v900 = vunpack.c.h.b16 %v175
    %v901 = vunpack.c.l.b16 %v176
    %v902 = vunpack.c.h.b16 %v176
    %v903 = vunpack.c.l.b16 %v177
    %v904 = vunpack.c.h.b16 %v177
    %v905 = vunpack.c.l.b16 %v178
    %v906 = vunpack.c.h.b16 %v178
    %v907 = vunpack.c.l.b16 %v179
    %v908 = vunpack.c.h.b16 %v179
    %v909 = vunpack.c.l.b16 %v180
    %v910 = vunpack.c.h.b16 %v180
    %v911 = vunpack.c.l.b16 %v181
    %v912 = vunpack.c.h.b16 %v181
    %v913 = vunpack.c.l.b16 %v182
    %v914 = vunpack.c.h.b16 %v182
    %v915 = vunpack.c.l.b16 %v183
    %v916 = vunpack.c.h.b16 %v183
    %v917 = vunpack.c.l.b16 %v184
    %v918 = vunpack.c.h.b16 %v184
    %v919 = vunpack.c.l.b16 %v185
    %v920 = vunpack.c.h.b16 %v185
    %v921 = vunpack.c.l.b16 %v186
    %v922 = vunpack.c.h.b16 %v186
    %v923 = vunpack.c.l.b16 %v187
    %v924 = vunpack.c.h.b16 %v187
    %v925 = vunpack.c.l.b16 %v188
    %v926 = vunpack.c.h.b16 %v188
    %v927 = vunpack.c.l.b16 %v189
    %v928 = vunpack.c.h.b16 %v189
    %v929 = vunpack.c.l.b16 %v190
    %v930 = vunpack.c.h.b16 %v190
    %v931 = vunpack.c.l.b16 %v191
    %v932 = vunpack.c.h.b16 %v191
    %v933 = vunpack.c.l.b16 %v192
    %v934 = vunpack.c.h.b16 %v192
    %v935 = vunpack.c.l.b16 %v193
    %v936 = vunpack.c.h.b16 %v193
    %v937 = vunpack.c.l.b16 %v194
    %v938 = vunpack.c.h.b16 %v194
    %v939 = vunpack.c.l.b16 %v195
    %v940 = vunpack.c.h.b16 %v195
    %v941 = vunpack.c.l.b16 %v196
    %v942 = vunpack.c.h.b16 %v196
    %v943 = vunpack.c.l.b16 %v197
    %v944 = vunpack.c.h.b16 %v197
    %v945 = vunpack.c.l.b16 %v198
    %v946 = vunpack.c.h.b16 %v198
    %v947 = vunpack.c.l.b16 %v199
    %v948 = vunpack.c.h.b16 %v199
    %v949 = vunpack.c.l.b16 %v200
    %v950 = vunpack.c.h.b16 %v200
    %v951 = vunpack.c.l.b16 %v201
    %v952 = vunpack.c.h.b16 %v201
    %v953 = vunpack.c.l.b16 %v202
    %v954 = vunpack.c.h.b16 %v202
    %v955 = vunpack.c.l.b16 %v203
    %v956 = vunpack.c.h.b16 %v203
    %v957 = vunpack.c.l.b16 %v204
    %v958 = vunpack.c.h.b16 %v204
    %v959 = vunpack.c.l.b16 %v205
    %v960 = vunpack.c.h.b16 %v205
    %v961 = vunpack.c.l.b16 %v206
    %v962 = vunpack.c.h.b16 %v206
    %v963 = vunpack.c.l.b16 %v207
    %v964 = vunpack.c.h.b16 %v207
    %v965 = vunpack.c.l.b16 %v208
    %v966 = vunpack.c.h.b16 %v208
    %v967 = vunpack.c.l.b16 %v209
    %v968 = vunpack.c.h.b16 %v209
    %v969 = vunpack.c.l.b16 %v210
    %v970 = vunpack.c.h.b16 %v210
    %v971 = vunpack.c.l.b16 %v211
    %v972 = vunpack.c.h.b16 %v211
    %v973 = vunpack.c.l.b16 %v212
    %v974 = vunpack.c.h.b16 %v212
    %v975 = vunpack.c.l.b16 %v213
    %v976 = vunpack.c.h.b16 %v213
    %v977 = vunpack.c.l.b16 %v214
    %v978 = vunpack.c.h.b16 %v214
    %v979 = vunpack.c.l.b16 %v215
    %v980 = vunpack.c.h.b16 %v215
    %v981 = vunpack.c.l.b16 %v216
    %v982 = vunpack.c.h.b16 %v216
    %v983 = vunpack.c.l.b16 %v217
    %v984 = vunpack.c.h.b16 %v217
    %v985 = vunpack.c.l.b16 %v218
    %v986 = vunpack.c.h.b16 %v218
    %v987 = vunpack.c.l.b16 %v219
    %v988 = vunpack.c.h.b16 %v219
    %v989 = vunpack.c.l.b16 %v220
    %v990 = vunpack.c.h.b16 %v220
    %v991 = vunpack.c.l.b16 %v221
    %v992 = vunpack.c.h.b16 %v221
    %v993 = vunpack.c.l.b16 %v222
    %v994 = vunpack.c.h.b16 %v222
    %v995 = vunpack.c.l.b16 %v223
    %v996 = vunpack.c.h.b16 %v223
    %v997 = vunpack.c.l.b16 %v224
    %v998 = vunpack.c.h.b16 %v224
    %v999 = vunpack.c.l.b16 %v225
    %v1000 = vunpack.c.h.b16 %v225
    %v1001 = vunpack.c.l.b16 %v226
    %v1002 = vunpack.c.h.b16 %v226
    %v1003 = vunpack.c.l.b16 %v227
    %v1004 = vunpack.c.h.b16 %v227
    %v1005 = vunpack.c.l.b16 %v228
    %v1006 = vunpack.c.h.b16 %v228
    %v1007 = vunpack.c.l.b16 %v229
    %v1008 = vunpack.c.h.b16 %v229
    %v1009 = vunpack.c.l.b16 %v230
    %v1010 = vunpack.c.h.b16 %v230
    %v1011 = vunpack.c.l.b16 %v231
    %v1012 = vunpack.c.h.b16 %v231
    %v1013 = vunpack.c.l.b16 %v232
    %v1014 = vunpack.c.h.b16 %v232
    %v1015 = vunpack.c.l.b16 %v233
    %v1016 = vunpack.c.h.b16 %v233
    %v1017 = vunpack.c.l.b16 %v234
    %v1018 = vunpack.c.h.b16 %v234
    %v1019 = vunpack.c.l.b16 %v235
    %v1020 = vunpack.c.h.b16 %v235
    %v1021 = vunpack.c.l.b16 %v236
    %v1022 = vunpack.c.h.b16 %v236
    %v1023 = vunpack.c.l.b16 %v237
    %v1024 = vunpack.c.h.b16 %v237
    %v1025 = vunpack.c.l.b16 %v238
    %v1026 = vunpack.c.h.b16 %v238
    %v1027 = vunpack.c.l.b16 %v239
    %v1028 = vunpack.c.h.b16 %v239
    %v1029 = vunpack.c.l.b16 %v240
    %v1030 = vunpack.c.h.b16 %v240
    %v1031 = vunpack.c.l.b16 %v241
    %v1032 = vunpack.c.h.b16 %v241
    %v1033 = vunpack.c.l.b16 %v242
    %v1034 = vunpack.c.h.b16 %v242
    %v1035 = vunpack.c.l.b16 %v243
    %v1036 = vunpack.c.h.b16 %v243
    %v1037 = vunpack.c.l.b16 %v244
    %v1038 = vunpack.c.h.b16 %v244
    %v1039 = vunpack.c.l.b16 %v245
    %v1040 = vunpack.c.h.b16 %v245
    %v1041 = vunpack.c.l.b16 %v246
    %v1042 = vunpack.c.h.b16 %v246
    %v1043 = vunpack.c.l.b16 %v247
    %v1044 = vunpack.c.h.b16 %v247
    %v1045 = vunpack.c.l.b16 %v248
    %v1046 = vunpack.c.h.b16 %v248
    %v1047 = vunpack.c.l.b16 %v249
    %v1048 = vunpack.c.h.b16 %v249
    %v1049 = vunpack.c.l.b16 %v250
    %v1050 = vunpack.c.h.b16 %v250
    %v1051 = vunpack.c.l.b16 %v251
    %v1052 = vunpack.c.h.b16 %v251
    %v1053 = vunpack.c.l.b16 %v252
    %v1054 = vunpack.c.h.b16 %v252
    %v1055 = vunpack.c.l.b16 %v253
    %v1056 = vunpack.c.h.b16 %v253
    %v1057 = vunpack.c.l.b16 %v254
    %v1058 = vunpack.c.h.b16 %v254
    %v1059 = vunpack.c.l.b16 %v255
    %v1060 = vunpack.c.h.b16 %v255
    %v1061 = vunpack.c.l.b16 %v256
    %v1062 = vunpack.c.h.b16 %v256
    %v1063 = vunpack.c.l.b16 %v257
    %v1064 = vunpack.c.h.b16 %v257
    %v1065 = vunpack.c.l.b16 %v258
    %v1066 = vunpack.c.h.b16 %v258
    %v1067 = vunpack.c.l.b16 %v259
    %v1068 = vunpack.c.h.b16 %v259
    %v1069 = vunpack.c.l.b16 %v260
    %v1070 = vunpack.c.h.b16 %v260
    %v1071 = vunpack.c.l.b16 %v261
    %v1072 = vunpack.c.h.b16 %v261
    %v1073 = vunpack.c.l.b16 %v262
    %v1074 = vunpack.c.h.b16 %v262
    %v1075 = vunpack.c.l.b16 %v263
    %v1076 = vunpack.c.h.b16 %v263
    %v1077 = vunpack.c.l.b16 %v264
    %v1078 = vunpack.c.h.b16 %v264
    %v1079 = vunpack.c.l.b16 %v265
    %v1080 = vunpack.c.h.b16 %v265
    %v1081 = vunpack.c.l.b16 %v266
    %v1082 = vunpack.c.h.b16 %v266
    %v1083 = vunpack.c.l.b16 %v267
    %v1084 = vunpack.c.h.b16 %v267
    %v1085 = vunpack.c.l.b16 %v268
    %v1086 = vunpack.c.h.b16 %v268
    %v1087 = vunpack.c.l.b16 %v269
    %v1088 = vunpack.c.h.b16 %v269
    %v1089 = vunpack.c.l.b16 %v270
    %v1090 = vunpack.c.h.b16 %v270
    %v1091 = vunpack.c.l.b16 %v271
    %v1092 = vunpack.c.h.b16 %v271
    %v1093 = vunpack.c.l.b16 %v272
    %v1094 = vunpack.c.h.b16 %v272
    %v1095 = vunpack.c.l.b16 %v273
    %v1096 = vunpack.c.h.b16 %v273
    %v1097 = vunpack.c.l.b16 %v274
    %v1098 = vunpack.c.h.b16 %v274
    %v1099 = vunpack.c.l.b16 %v275
    %v1100 = vunpack.c.h.b16 %v275
    %v1101 = vunpack.c.l.b16 %v276
    %v1102 = vunpack.c.h.b16 %v276
    %v1103 = vunpack.c.l.b16 %v277
    %v1104 = vunpack.c.h.b16 %v277
    %v1105 = vunpack.c.l.b16 %v278
    %v1106 = vunpack.c.h.b16 %v278
    %v1107 = vunpack.c.l.b16 %v279
    %v1108 = vunpack.c.h.b16 %v279
    %v1109 = vunpack.c.l.b16 %v280
    %v1110 = vunpack.c.h.b16 %v280
    %v1111 = vunpack.c.l.b16 %v281
    %v1112 = vunpack.c.h.b16 %v281
    %v1113 = vunpack.c.l.b16 %v282
    %v1114 = vunpack.c.h.b16 %v282
    %v1115 = vunpack.c.l.b16 %v283
    %v1116 = vunpack.c.h.b16 %v283
    %v1117 = vunpack.c.l.b16 %v284
    %v1118 = vunpack.c.h.b16 %v284
    %v1119 = vunpack.c.l.b16 %v285
    %v1120 = vunpack.c.h.b16 %v285
    %v1121 = vunpack.c.l.b16 %v286
    %v1122 = vunpack.c.h.b16 %v286
    %v1123 = vunpack.c.l.b16 %v287
    %v1124 = vunpack.c.h.b16 %v287
    %v1125 = vunpack.c.l.b16 %v288
    %v1126 = vunpack.c.h.b16 %v288
    %v1127 = vunpack.c.l.b16 %v289
    %v1128 = vunpack.c.h.b16 %v289
    %v1129 = vunpack.c.l.b16 %v290
    %v1130 = vunpack.c.h.b16 %v290
    %v1131 = vunpack.c.l.b16 %v291
    %v1132 = vunpack.c.h.b16 %v291
    %v1133 = vunpack.c.l.b16 %v292
    %v1134 = vunpack.c.h.b16 %v292
    %v1135 = vunpack.c.l.b16 %v293
    %v1136 = vunpack.c.h.b16 %v293
    %v1137 = vunpack.c.l.b16 %v294
    %v1138 = vunpack.c.h.b16 %v294
    %v1139 = vunpack.c.l.b16 %v295
    %v1140 = vunpack.c.h.b16 %v295
    %v1141 = vunpack.c.l.b16 %v296
    %v1142 = vunpack.c.h.b16 %v296
    %v1143 = vunpack.c.l.b16 %v297
    %v1144 = vunpack.c.h.b16 %v297
    %v1145 = vunpack.c.l.b16 %v298
    %v1146 = vunpack.c.h.b16 %v298
    %v1147 = vunpack.c.l.b16 %v299
    %v1148 = vunpack.c.h.b16 %v299
    %v1149 = vunpack.c.l.b16 %v300
    %v1150 = vunpack.c.h.b16 %v300
    %v1151 = vunpack.c.l.b16 %v301
    %v1152 = vunpack.c.h.b16 %v301
    %v1153 = vunpack.c.l.b16 %v302
    %v1154 = vunpack.c.h.b16 %v302
    %v1155 = vunpack.c.l.b16 %v303
    %v1156 = vunpack.c.h.b16 %v303
    %v1157 = vunpack.c.l.b16 %v304
    %v1158 = vunpack.c.h.b16 %v304
    %v1159 = vunpack.c.l.b16 %v305
    %v1160 = vunpack.c.h.b16 %v305
    %v1161 = vunpack.c.l.b16 %v306
    %v1162 = vunpack.c.h.b16 %v306
    %v1163 = vunpack.c.l.b16 %v307
    %v1164 = vunpack.c.h.b16 %v307
    %v1165 = vunpack.c.l.b16 %v308
    %v1166 = vunpack.c.h.b16 %v308
    %v1167 = vunpack.c.l.b16 %v309
    %v1168 = vunpack.c.h.b16 %v309
    %v1169 = vunpack.c.l.b16 %v310
    %v1170 = vunpack.c.h.b16 %v310
    %v1171 = vunpack.c.l.b16 %v311
    %v1172 = vunpack.c.h.b16 %v311
    %v1173 = vunpack.c.l.b16 %v312
    %v1174 = vunpack.c.h.b16 %v312
    %v1175 = vunpack.c.l.b16 %v313
    %v1176 = vunpack.c.h.b16 %v313
    %v1177 = vunpack.c.l.b16 %v314
    %v1178 = vunpack.c.h.b16 %v314
    %v1179 = vunpack.c.l.b16 %v315
    %v1180 = vunpack.c.h.b16 %v315
    %v1181 = vunpack.c.l.b16 %v316
    %v1182 = vunpack.c.h.b16 %v316
    %v1183 = vunpack.c.l.b16 %v317
    %v1184 = vunpack.c.h.b16 %v317
    %v1185 = vunpack.c.l.b16 %v318
    %v1186 = vunpack.c.h.b16 %v318
    %v1187 = vunpack.c.l.b16 %v319
    %v1188 = vunpack.c.h.b16 %v319
    %v1189 = vunpack.c.l.b16 %v320
    %v1190 = vunpack.c.h.b16 %v320
    %v1191 = vunpack.c.l.b16 %v321
    %v1192 = vunpack.c.h.b16 %v321
    %v1193 = vunpack.c.l.b16 %v322
    %v1194 = vunpack.c.h.b16 %v322
    %v1195 = vunpack.c.l.b16 %v323
    %v1196 = vunpack.c.h.b16 %v323
    %v1197 = vunpack.c.l.b16 %v324
    %v1198 = vunpack.c.h.b16 %v324
    %v1199 = vunpack.c.l.b16 %v325
    %v1200 = vunpack.c.h.b16 %v325
    %v1201 = vunpack.c.l.b16 %v326
    %v1202 = vunpack.c.h.b16 %v326
    %v1203 = vunpack.c.l.b16 %v327
    %v1204 = vunpack.c.h.b16 %v327
    %v1205 = vunpack.c.l.b16 %v328
    %v1206 = vunpack.c.h.b16 %v328
    %v1207 = vunpack.c.l.b16 %v329
    %v1208 = vunpack.c.h.b16 %v329
    %v1209 = vunpack.c.l.b16 %v330
    %v1210 = vunpack.c.h.b16 %v330
    %v1211 = vunpack.c.l.b16 %v331
    %v1212 = vunpack.c.h.b16 %v331
    %v1213 = vunpack.c.l.b16 %v332
    %v1214 = vunpack.c.h.b16 %v332
    %v1215 = vunpack.c.l.b16 %v333
    %v1216 = vunpack.c.h.b16 %v333
    %v1217 = vunpack.c.l.b16 %v334
    %v1218 = vunpack.c.h.b16 %v334
    %v1219 = vunpack.c.l.b16 %v335
    %v1220 = vunpack.c.h.b16 %v335
    %v1221 = vunpack.c.l.b16 %v336
    %v1222 = vunpack.c.h.b16 %v336
    %v1223 = vunpack.c.l.b16 %v337
    %v1224 = vunpack.c.h.b16 %v337
    %v1225 = vunpack.c.l.b16 %v338
    %v1226 = vunpack.c.h.b16 %v338
    %v1227 = vunpack.c.l.b16 %v339
    %v1228 = vunpack.c.h.b16 %v339
    %v1229 = vunpack.c.l.b16 %v340
    %v1230 = vunpack.c.h.b16 %v340
    %v1231 = vunpack.c.l.b16 %v341
    %v1232 = vunpack.c.h.b16 %v341
    %v1233 = vunpack.c.l.b16 %v342
    %v1234 = vunpack.c.h.b16 %v342
    %v1235 = vunpack.c.l.b16 %v343
    %v1236 = vunpack.c.h.b16 %v343
    %v1237 = vunpack.c.l.b16 %v344
    %v1238 = vunpack.c.h.b16 %v344
    %v1239 = vunpack.c.l.b16 %v345
    %v1240 = vunpack.c.h.b16 %v345
    %v1241 = vunpack.c.l.b16 %v346
    %v1242 = vunpack.c.h.b16 %v346
    %v1243 = vunpack.c.l.b16 %v347
    %v1244 = vunpack.c.h.b16 %v347
    %v1245 = vunpack.c.l.b16 %v348
    %v1246 = vunpack.c.h.b16 %v348
    %v1247 = vunpack.c.l.b16 %v349
    %v1248 = vunpack.c.h.b16 %v349
    %v1249 = vunpack.c.l.b16 %v350
    %v1250 = vunpack.c.h.b16 %v350
    %v1251 = vunpack.c.l.b16 %v351
    %v1252 = vunpack.c.h.b16 %v351
    %v1253 = vunpack.c.l.b16 %v352
    %v1254 = vunpack.c.h.b16 %v352
    %v1255 = vunpack.c.l.b16 %v353
    %v1256 = vunpack.c.h.b16 %v353
    %v1257 = vunpack.c.l.b16 %v354
    %v1258 = vunpack.c.h.b16 %v354
    %v1259 = vunpack.c.l.b16 %v355
    %v1260 = vunpack.c.h.b16 %v355
    %v1261 = vunpack.c.l.b16 %v356
    %v1262 = vunpack.c.h.b16 %v356
    %v1263 = vunpack.c.l.b16 %v357
    %v1264 = vunpack.c.h.b16 %v357
    %v1265 = vunpack.c.l.b16 %v358
    %v1266 = vunpack.c.h.b16 %v358
    %v1267 = vunpack.c.l.b16 %v359
    %v1268 = vunpack.c.h.b16 %v359
    %v1269 = vunpack.c.l.b16 %v360
    %v1270 = vunpack.c.h.b16 %v360
    %v1271 = vunpack.c.l.b16 %v361
    %v1272 = vunpack.c.h.b16 %v361
    %v1273 = vunpack.c.l.b16 %v362
    %v1274 = vunpack.c.h.b16 %v362
    %v1275 = vunpack.c.l.b16 %v363
    %v1276 = vunpack.c.h.b16 %v363
    %v1277 = vunpack.c.l.b16 %v364
    %v1278 = vunpack.c.h.b16 %v364
    %v1279 = vunpack.c.l.b16 %v365
    %v1280 = vunpack.c.h.b16 %v365
    %v1281 = vunpack.c.l.b16 %v366
    %v1282 = vunpack.c.h.b16 %v366
    %v1283 = vunpack.c.l.b16 %v367
    %v1284 = vunpack.c.h.b16 %v367
    %v1285 = vpack.c.b16 %v715, %v709
    %v1286 = vpack.c.b16 %v716, %v710
    %v1287 = vpack.c.b16 %v717, %v711
    %v1288 = vpack.c.b16 %v718, %v712
    %v1289 = vpack.c.b16 %v719, %v713
    %v1290 = vpack.c.b16 %v720, %v714
    %v1291 = vpack.c.b16 %v727, %v721
    %v1292 = vpack.c.b16 %v728, %v722
    %v1293 = vpack.c.b16 %v729, %v723
    %v1294 = vpack.c.b16 %v730, %v724
    %v1295 = vpack.c.b16 %v731, %v725
    %v1296 = vpack.c.b16 %v732, %v726
    %v1297 = vpack.c.b16 %v739, %v733
    %v1298 = vpack.c.b16 %v740, %v734
    %v1299 = vpack.c.b16 %v741, %v735
    %v1300 = vpack.c.b16 %v742, %v736
    %v1301 = vpack.c.b16 %v743, %v737
    %v1302 = vpack.c.b16 %v744, %v738
    %v1303 = vpack.c.b16 %v751, %v745
    %v1304 = vpack.c.b16 %v752, %v746
    %v1305 = vpack.c.b16 %v753, %v747
    %v1306 = vpack.c.b16 %v754, %v748
    %v1307 = vpack.c.b16 %v755, %v749
    %v1308 = vpack.c.b16 %v756, %v750
    %v1309 = vpack.c.b16 %v763, %v757
    %v1310 = vpack.c.b16 %v764, %v758
    %v1311 = vpack.c.b16 %v765, %v759
    %v1312 = vpack.c.b16 %v766, %v760
    %v1313 = vpack.c.b16 %v767, %v761
    %v1314 = vpack.c.b16 %v768, %v762
    %v1315 = vpack.c.b16 %v775, %v769
    %v1316 = vpack.c.b16 %v776, %v770
    %v1317 = vpack.c.b16 %v777, %v771
    %v1318 = vpack.c.b16 %v778, %v772
    %v1319 = vpack.c.b16 %v779, %v773
    %v1320 = vpack.c.b16 %v780, %v774
    %v1321 = vpack.c.b16 %v787, %v781
    %v1322 = vpack.c.b16 %v788, %v782
    %v1323 = vpack.c.b16 %v789, %v783
    %v1324 = vpack.c.b16 %v790, %v784
    %v1325 = vpack.c.b16 %v791, %v785
    %v1326 = vpack.c.b16 %v792, %v786
    %v1327 = vpack.c.b16 %v799, %v793
    %v1328 = vpack.c.b16 %v800, %v794
    %v1329 = vpack.c.b16 %v801, %v795
    %v1330 = vpack.c.b16 %v802, %v796
    %v1331 = vpack.c.b16 %v803, %v797
    %v1332 = vpack.c.b16 %v804, %v798
    %v1333 = vpack.c.b16 %v811, %v805
    %v1334 = vpack.c.b16 %v812, %v806
    %v1335 = vpack.c.b16 %v813, %v807
    %v1336 = vpack.c.b16 %v814, %v808
    %v1337 = vpack.c.b16 %v815, %v809
    %v1338 = vpack.c.b16 %v816, %v810
    %v1339 = vpack.c.b16 %v823, %v817
    %v1340 = vpack.c.b16 %v824, %v818
    %v1341 = vpack.c.b16 %v825, %v819
    %v1342 = vpack.c.b16 %v826, %v820
    %v1343 = vpack.c.b16 %v827, %v821
    %v1344 = vpack.c.b16 %v828, %v822
    %v1345 = vpack.c.b16 %v835, %v829
    %v1346 = vpack.c.b16 %v836, %v830
    %v1347 = vpack.c.b16 %v837, %v831
    %v1348 = vpack.c.b16 %v838, %v832
    %v1349 = vpack.c.b16 %v839, %v833
    %v1350 = vpack.c.b16 %v840, %v834
    %v1351 = vpack.c.b16 %v847, %v841
    %v1352 = vpack.c.b16 %v848, %v842
    %v1353 = vpack.c.b16 %v849, %v843
    %v1354 = vpack.c.b16 %v850, %v844
    %v1355 = vpack.c.b16 %v851, %v845
    %v1356 = vpack.c.b16 %v852, %v846
    %v1357 = vpack.c.b16 %v859, %v853
    %v1358 = vpack.c.b16 %v860, %v854
    %v1359 = vpack.c.b16 %v861, %v855
    %v1360 = vpack.c.b16 %v862, %v856
    %v1361 = vpack.c.b16 %v863, %v857
    %v1362 = vpack.c.b16 %v864, %v858
    %v1363 = vpack.c.b16 %v871, %v865
    %v1364 = vpack.c.b16 %v872, %v866
    %v1365 = vpack.c.b16 %v873, %v867
    %v1366 = vpack.c.b16 %v874, %v868
    %v1367 = vpack.c.b16 %v875, %v869
    %v1368 = vpack.c.b16 %v876, %v870
    %v1369 = vpack.c.b16 %v883, %v877
    %v1370 = vpack.c.b16 %v884, %v878
    %v1371 = vpack.c.b16 %v885, %v879
    %v1372 = vpack.c.b16 %v886, %v880
    %v1373 = vpack.c.b16 %v887, %v881
    %v1374 = vpack.c.b16 %v888, %v882
    %v1375 = vpack.c.b16 %v895, %v889
    %v1376 = vpack.c.b16 %v896, %v890
    %v1377 = vpack.c.b16 %v897, %v891
    %v1378 = vpack.c.b16 %v898, %v892
    %v1379 = vpack.c.b16 %v899, %v893
    %v1380 = vpack.c.b16 %v900, %v894
    %v1381 = vpack.c.b16 %v907, %v901
    %v1382 = vpack.c.b16 %v908, %v902
    %v1383 = vpack.c.b16 %v909, %v903
    %v1384 = vpack.c.b16 %v910, %v904
    %v1385 = vpack.c.b16 %v911, %v905
    %v1386 = vpack.c.b16 %v912, %v906
    %v1387 = vpack.c.b16 %v919, %v913
    %v1388 = vpack.c.b16 %v920, %v914
    %v1389 = vpack.c.b16 %v921, %v915
    %v1390 = vpack.c.b16 %v922, %v916
    %v1391 = vpack.c.b16 %v923, %v917
    %v1392 = vpack.c.b16 %v924, %v918
    %v1393 = vpack.c.b16 %v931, %v925
    %v1394 = vpack.c.b16 %v932, %v926
    %v1395 = vpack.c.b16 %v933, %v927
    %v1396 = vpack.c.b16 %v934, %v928
    %v1397 = vpack.c.b16 %v935, %v929
    %v1398 = vpack.c.b16 %v936, %v930
    %v1399 = vpack.c.b16 %v943, %v937
    %v1400 = vpack.c.b16 %v944, %v938
    %v1401 = vpack.c.b16 %v945, %v939
    %v1402 = vpack.c.b16 %v946, %v940
    %v1403 = vpack.c.b16 %v947, %v941
    %v1404 = vpack.c.b16 %v948, %v942
    %v1405 = vpack.c.b16 %v955, %v949
    %v1406 = vpack.c.b16 %v956, %v950
    %v1407 = vpack.c.b16 %v957, %v951
    %v1408 = vpack.c.b16 %v958, %v952
    %v1409 = vpack.c.b16 %v959, %v953
    %v1410 = vpack.c.b16 %v960, %v954
    %v1411 = vpack.c.b16 %v967, %v961
    %v1412 = vpack.c.b16 %v968, %v962
    %v1413 = vpack.c.b16 %v969, %v963
    %v1414 = vpack.c.b16 %v970, %v964
    %v1415 = vpack.c.b16 %v971, %v965
    %v1416 = vpack.c.b16 %v972, %v966
    %v1417 = vpack.c.b16 %v979, %v973
    %v1418 = vpack.c.b16 %v980, %v974
    %v1419 = vpack.c.b16 %v981, %v975
    %v1420 = vpack.c.b16 %v982, %v976
    %v1421 = vpack.c.b16 %v983, %v977
    %v1422 = vpack.c.b16 %v984, %v978
    %v1423 = vpack.c.b16 %v991, %v985
    %v1424 = vpack.c.b16 %v992, %v986
    %v1425 = vpack.c.b16 %v993, %v987
    %v1426 = vpack.c.b16 %v994, %v988
    %v1427 = vpack.c.b16 %v995, %v989
    %v1428 = vpack.c.b16 %v996, %v990
    %v1429 = vpack.c.b16 %v1003, %v997
    %v1430 = vpack.c.b16 %v1004, %v998
    %v1431 = vpack.c.b16 %v1005, %v999
    %v1432 = vpack.c.b16 %v1006, %v1000
    %v1433 = vpack.c.b16 %v1007, %v1001
    %v1434 = vpack.c.b16 %v1008, %v1002
    %v1435 = vpack.c.b16 %v1015, %v1009
    %v1436 = vpack.c.b16 %v1016, %v1010
    %v1437 = vpack.c.b16 %v1017, %v1011
    %v1438 = vpack.c.b16 %v1018, %v1012
    %v1439 = vpack.c.b16 %v1019, %v1013
    %v1440 = vpack.c.b16 %v1020, %v1014
    %v1441 = vpack.c.b16 %v1027, %v1021
    %v1442 = vpack.c.b16 %v1028, %v1022
    %v1443 = vpack.c.b16 %v1029, %v1023
    %v1444 = vpack.c.b16 %v1030, %v1024
    %v1445 = vpack.c.b16 %v1031, %v1025
    %v1446 = vpack.c.b16 %v1032, %v1026
    %v1447 = vpack.c.b16 %v1039, %v1033
    %v1448 = vpack.c.b16 %v1040, %v1034
    %v1449 = vpack.c.b16 %v1041, %v1035
    %v1450 = vpack.c.b16 %v1042, %v1036
    %v1451 = vpack.c.b16 %v1043, %v1037
    %v1452 = vpack.c.b16 %v1044, %v1038
    %v1453 = vpack.c.b16 %v1051, %v1045
    %v1454 = vpack.c.b16 %v1052, %v1046
    %v1455 = vpack.c.b16 %v1053, %v1047
    %v1456 = vpack.c.b16 %v1054, %v1048
    %v1457 = vpack.c.b16 %v1055, %v1049
    %v1458 = vpack.c.b16 %v1056, %v1050
    %v1459 = vpack.c.b16 %v1063, %v1057
    %v1460 = vpack.c.b16 %v1064, %v1058
    %v1461 = vpack.c.b16 %v1065, %v1059
    %v1462 = vpack.c.b16 %v1066, %v1060
    %v1463 = vpack.c.b16 %v1067, %v1061
    %v1464 = vpack.c.b16 %v1068, %v1062
    %v1465 = vpack.c.b16 %v1075, %v1069
    %v1466 = vpack.c.b16 %v1076, %v1070
    %v1467 = vpack.c.b16 %v1077, %v1071
    %v1468 = vpack.c.b16 %v1078, %v1072
    %v1469 = vpack.c.b16 %v1079, %v1073
    %v1470 = vpack.c.b16 %v1080, %v1074
    %v1471 = vpack.c.b16 %v1087, %v1081
    %v1472 = vpack.c.b16 %v1088, %v1082
    %v1473 = vpack.c.b16 %v1089, %v1083
    %v1474 = vpack.c.b16 %v1090, %v1084
    %v1475 = vpack.c.b16 %v1091, %v1085
    %v1476 = vpack.c.b16 %v1092, %v1086
    %v1477 = vpack.c.b16 %v1099, %v1093
    %v1478 = vpack.c.b16 %v1100, %v1094
    %v1479 = vpack.c.b16 %v1101, %v1095
    %v1480 = vpack.c.b16 %v1102, %v1096
    %v1481 = vpack.c.b16 %v1103, %v1097
    %v1482 = vpack.c.b16 %v1104, %v1098
    %v1483 = vpack.c.b16 %v1111, %v1105
    %v1484 = vpack.c.b16 %v1112, %v1106
    %v1485 = vpack.c.b16 %v1113, %v1107
    %v1486 = vpack.c.b16 %v1114, %v1108
    %v1487 = vpack.c.b16 %v1115, %v1109
    %v1488 = vpack.c.b16 %v1116, %v1110
    %v1489 = vpack.c.b16 %v1123, %v1117
    %v1490 = vpack.c.b16 %v1124, %v1118
    %v1491 = vpack.c.b16 %v1125, %v1119
    %v1492 = vpack.c.b16 %v1126, %v1120
    %v1493 = vpack.c.b16 %v1127, %v1121
    %v1494 = vpack.c.b16 %v1128, %v1122
    %v1495 = vpack.c.b16 %v1135, %v1129
    %v1496 = vpack.c.b16 %v1136, %v1130
    %v1497 = vpack.c.b16 %v1137, %v1131
    %v1498 = vpack.c.b16 %v1138, %v1132
    %v1499 = vpack.c.b16 %v1139, %v1133
    %v1500 = vpack.c.b16 %v1140, %v1134
    %v1501 = vpack.c.b16 %v1147, %v1141
    %v1502 = vpack.c.b16 %v1148, %v1142
    %v1503 = vpack.c.b16 %v1149, %v1143
    %v1504 = vpack.c.b16 %v1150, %v1144
    %v1505 = vpack.c.b16 %v1151, %v1145
    %v1506 = vpack.c.b16 %v1152, %v1146
    %v1507 = vpack.c.b16 %v1159, %v1153
    %v1508 = vpack.c.b16 %v1160, %v1154
    %v1509 = vpack.c.b16 %v1161, %v1155
    %v1510 = vpack.c.b16 %v1162, %v1156
    %v1511 = vpack.c.b16 %v1163, %v1157
    %v1512 = vpack.c.b16 %v1164, %v1158
    %v1513 = vpack.c.b16 %v1171, %v1165
    %v1514 = vpack.c.b16 %v1172, %v1166
    %v1515 = vpack.c.b16 %v1173, %v1167
    %v1516 = vpack.c.b16 %v1174, %v1168
    %v1517 = vpack.c.b16 %v1175, %v1169
    %v1518 = vpack.c.b16 %v1176, %v1170
    %v1519 = vpack.c.b16 %v1183, %v1177
    %v1520 = vpack.c.b16 %v1184, %v1178
    %v1521 = vpack.c.b16 %v1185, %v1179
    %v1522 = vpack.c.b16 %v1186, %v1180
    %v1523 = vpack.c.b16 %v1187, %v1181
    %v1524 = vpack.c.b16 %v1188, %v1182
    %v1525 = vpack.c.b16 %v1195, %v1189
    %v1526 = vpack.c.b16 %v1196, %v1190
    %v1527 = vpack.c.b16 %v1197, %v1191
    %v1528 = vpack.c.b16 %v1198, %v1192
    %v1529 = vpack.c.b16 %v1199, %v1193
    %v1530 = vpack.c.b16 %v1200, %v1194
    %v1531 = vpack.c.b16 %v1207, %v1201
    %v1532 = vpack.c.b16 %v1208, %v1202
    %v1533 = vpack.c.b16 %v1209, %v1203
    %v1534 = vpack.c.b16 %v1210, %v1204
    %v1535 = vpack.c.b16 %v1211, %v1205
    %v1536 = vpack.c.b16 %v1212, %v1206
    %v1537 = vpack.c.b16 %v1219, %v1213
    %v1538 = vpack.c.b16 %v1220, %v1214
    %v1539 = vpack.c.b16 %v1221, %v1215
    %v1540 = vpack.c.b16 %v1222, %v1216
    %v1541 = vpack.c.b16 %v1223, %v1217
    %v1542 = vpack.c.b16 %v1224, %v1218
    %v1543 = vpack.c.b16 %v1231, %v1225
    %v1544 = vpack.c.b16 %v1232, %v1226
    %v1545 = vpack.c.b16 %v1233, %v1227
    %v1546 = vpack.c.b16 %v1234, %v1228
    %v1547 = vpack.c.b16 %v1235, %v1229
    %v1548 = vpack.c.b16 %v1236, %v1230
    %v1549 = vpack.c.b16 %v1243, %v1237
    %v1550 = vpack.c.b16 %v1244, %v1238
    %v1551 = vpack.c.b16 %v1245, %v1239
    %v1552 = vpack.c.b16 %v1246, %v1240
    %v1553 = vpack.c.b16 %v1247, %v1241
    %v1554 = vpack.c.b16 %v1248, %v1242
    %v1555 = vpack.c.b16 %v1255, %v1249
    %v1556 = vpack.c.b16 %v1256, %v1250
    %v1557 = vpack.c.b16 %v1257, %v1251
    %v1558 = vpack.c.b16 %v1258, %v1252
    %v1559 = vpack.c.b16 %v1259, %v1253
    %v1560 = vpack.c.b16 %v1260, %v1254
    %v1561 = vpack.c.b16 %v1267, %v1261
    %v1562 = vpack.c.b16 %v1268, %v1262
    %v1563 = vpack.c.b16 %v1269, %v1263
    %v1564 = vpack.c.b16 %v1270, %v1264
    %v1565 = vpack.c.b16 %v1271, %v1265
    %v1566 = vpack.c.b16 %v1272, %v1266
    %v1567 = vpack.c.b16 %v1279, %v1273
    %v1568 = vpack.c.b16 %v1280, %v1274
    %v1569 = vpack.c.b16 %v1281, %v1275
    %v1570 = vpack.c.b16 %v1282, %v1276
    %v1571 = vpack.c.b16 %v1283, %v1277
    %v1572 = vpack.c.b16 %v1284, %v1278
    %1861 = vmatprep.subr.bf16.mxu0 %v1328
    %1862 = vmatpush1.bf16.msra.mxu0 %v1327
    %1863 = vmatprep.subr.bf16.mxu0 %v1322
    %1864 = vmatpush1.bf16.msra.mxu0 %v1321
    %1865 = vmatprep.subr.bf16.mxu0 %v1316
    %1866 = vmatpush1.bf16.msra.mxu0 %v1315
    %1867 = vmatprep.subr.bf16.mxu0 %v1310
    %1868 = vmatpush1.bf16.msra.mxu0 %v1309
    %1869 = vmatprep.subr.bf16.mxu0 %v1304
    %1870 = vmatpush1.bf16.msra.mxu0 %v1303
    %1871 = vmatprep.subr.bf16.mxu0 %v1298
    %1872 = vmatpush1.bf16.msra.mxu0 %v1297
    %1873 = vmatprep.subr.bf16.mxu0 %v1292
    %1874 = vmatpush1.bf16.msra.mxu0 %v1291
    %1875 = vmatprep.subr.bf16.mxu0 %v1286
    %1876 = vmatpush1.bf16.msra.mxu0 %v1285
    %1877 = vmatprep.subr.bf16.mxu0 %v1376
    %1878 = vmatpush2.bf16.msra.mxu0 %v1375
    %1879 = vmatprep.subr.bf16.mxu0 %v1370
    %1880 = vmatpush2.bf16.msra.mxu0 %v1369
    %1881 = vmatprep.subr.bf16.mxu0 %v1364
    %1882 = vmatpush2.bf16.msra.mxu0 %v1363
    %1883 = vmatprep.subr.bf16.mxu0 %v1358
    %1884 = vmatpush2.bf16.msra.mxu0 %v1357
    %1885 = vmatprep.subr.bf16.mxu0 %v1352
    %1886 = vmatpush2.bf16.msra.mxu0 %v1351
    %1887 = vmatprep.subr.bf16.mxu0 %v1346
    %1888 = vmatpush2.bf16.msra.mxu0 %v1345
    %1889 = vmatprep.subr.bf16.mxu0 %v1340
    %1890 = vmatpush2.bf16.msra.mxu0 %v1339
    %1891 = vmatprep.subr.bf16.mxu0 %v1334
    %1892 = vmatpush2.bf16.msra.mxu0 %v1333
    %1893 = vmatprep.mubr.bf16.mxu0 %v410
    %1894 = vmatmul.mubr.bf16.gmra.mxu0 %v409
    %v1895 = vpop.f32.mrf.mxu0
    %v1896 = vadd.f32 %v373, %v1895
    %v1897 = vpop.f32.mrf.mxu0
    %v1898 = vadd.f32 %v377, %v1897
    %v1899 = vpop.f32.mrf.mxu0
    %v1900 = vpop.f32.mrf.mxu0
    %1901 = vdwg.mxu0
    %1902 = vmatprep.subr.bf16.mxu0 %v1424
    %1903 = vmatpush1.bf16.msra.mxu0 %v1423
    %1904 = vmatprep.subr.bf16.mxu0 %v1418
    %1905 = vmatpush1.bf16.msra.mxu0 %v1417
    %1906 = vmatprep.subr.bf16.mxu0 %v1412
    %1907 = vmatpush1.bf16.msra.mxu0 %v1411
    %1908 = vmatprep.subr.bf16.mxu0 %v1406
    %1909 = vmatpush1.bf16.msra.mxu0 %v1405
    %1910 = vmatprep.subr.bf16.mxu0 %v1400
    %1911 = vmatpush1.bf16.msra.mxu0 %v1399
    %1912 = vmatprep.subr.bf16.mxu0 %v1394
    %1913 = vmatpush1.bf16.msra.mxu0 %v1393
    %1914 = vmatprep.subr.bf16.mxu0 %v1388
    %1915 = vmatpush1.bf16.msra.mxu0 %v1387
    %1916 = vmatprep.subr.bf16.mxu0 %v1382
    %1917 = vmatpush1.bf16.msra.mxu0 %v1381
    %1918 = vmatprep.subr.bf16.mxu0 %v1472
    %1919 = vmatpush2.bf16.msra.mxu0 %v1471
    %1920 = vmatprep.subr.bf16.mxu0 %v1466
    %1921 = vmatpush2.bf16.msra.mxu0 %v1465
    %1922 = vmatprep.subr.bf16.mxu0 %v1460
    %1923 = vmatpush2.bf16.msra.mxu0 %v1459
    %1924 = vmatprep.subr.bf16.mxu0 %v1454
    %1925 = vmatpush2.bf16.msra.mxu0 %v1453
    %1926 = vmatprep.subr.bf16.mxu0 %v1448
    %1927 = vmatpush2.bf16.msra.mxu0 %v1447
    %1928 = vmatprep.subr.bf16.mxu0 %v1442
    %1929 = vmatpush2.bf16.msra.mxu0 %v1441
    %1930 = vmatprep.subr.bf16.mxu0 %v1436
    %1931 = vmatpush2.bf16.msra.mxu0 %v1435
    %1932 = vmatprep.subr.bf16.mxu0 %v1430
    %1933 = vmatpush2.bf16.msra.mxu0 %v1429
    %1934 = vmatprep.mubr.bf16.mxu0 %v412
    %1935 = vmatmul.mubr.bf16.gmra.mxu0 %v411
    %v1936 = vpop.f32.mrf.mxu0
    %v1937 = vadd.f32 %v1896, %v1936
    %v1938 = vpop.f32.mrf.mxu0
    %v1939 = vadd.f32 %v1898, %v1938
    %v1940 = vpop.f32.mrf.mxu0
    %v1941 = vpop.f32.mrf.mxu0
    %1942 = vdwg.mxu0
    %1943 = vmatprep.subr.bf16.mxu0 %v1520
    %1944 = vmatpush1.bf16.msra.mxu0 %v1519
    %1945 = vmatprep.subr.bf16.mxu0 %v1514
    %1946 = vmatpush1.bf16.msra.mxu0 %v1513
    %1947 = vmatprep.subr.bf16.mxu0 %v1508
    %1948 = vmatpush1.bf16.msra.mxu0 %v1507
    %1949 = vmatprep.subr.bf16.mxu0 %v1502
    %1950 = vmatpush1.bf16.msra.mxu0 %v1501
    %1951 = vmatprep.subr.bf16.mxu0 %v1496
    %1952 = vmatpush1.bf16.msra.mxu0 %v1495
    %1953 = vmatprep.subr.bf16.mxu0 %v1490
    %1954 = vmatpush1.bf16.msra.mxu0 %v1489
    %1955 = vmatprep.subr.bf16.mxu0 %v1484
    %1956 = vmatpush1.bf16.msra.mxu0 %v1483
    %1957 = vmatprep.subr.bf16.mxu0 %v1478
    %1958 = vmatpush1.bf16.msra.mxu0 %v1477
    %1959 = vmatprep.subr.bf16.mxu0 %v1568
    %1960 = vmatpush2.bf16.msra.mxu0 %v1567
    %1961 = vmatprep.subr.bf16.mxu0 %v1562
    %1962 = vmatpush2.bf16.msra.mxu0 %v1561
    %1963 = vmatprep.subr.bf16.mxu0 %v1556
    %1964 = vmatpush2.bf16.msra.mxu0 %v1555
    %1965 = vmatprep.subr.bf16.mxu0 %v1550
    %1966 = vmatpush2.bf16.msra.mxu0 %v1549
    %1967 = vmatprep.subr.bf16.mxu0 %v1544
    %1968 = vmatpush2.bf16.msra.mxu0 %v1543
    %1969 = vmatprep.subr.bf16.mxu0 %v1538
    %1970 = vmatpush2.bf16.msra.mxu0 %v1537
    %1971 = vmatprep.subr.bf16.mxu0 %v1532
    %1972 = vmatpush2.bf16.msra.mxu0 %v1531
    %1973 = vmatprep.subr.bf16.mxu0 %v1526
    %1974 = vmatpush2.bf16.msra.mxu0 %v1525
    %1975 = vmatprep.mubr.bf16.mxu0 %v414
    %1976 = vmatmul.mubr.bf16.gmra.mxu0 %v413
    %v1977 = vpop.f32.mrf.mxu0
    %v1978 = vadd.f32 %v1937, %v1977
    %v1979 = vpop.f32.mrf.mxu0
    %v1980 = vadd.f32 %v1939, %v1979
    %v1981 = vpop.f32.mrf.mxu0
    %v1982 = vpop.f32.mrf.mxu0
    %1983 = vdwg.mxu0
    %1984 = vmatprep.subr.bf16.mxu0 %v1330
    %1985 = vmatpush1.bf16.msra.mxu0 %v1329
    %1986 = vmatprep.subr.bf16.mxu0 %v1324
    %1987 = vmatpush1.bf16.msra.mxu0 %v1323
    %1988 = vmatprep.subr.bf16.mxu0 %v1318
    %1989 = vmatpush1.bf16.msra.mxu0 %v1317
    %1990 = vmatprep.subr.bf16.mxu0 %v1312
    %1991 = vmatpush1.bf16.msra.mxu0 %v1311
    %1992 = vmatprep.subr.bf16.mxu0 %v1306
    %1993 = vmatpush1.bf16.msra.mxu0 %v1305
    %1994 = vmatprep.subr.bf16.mxu0 %v1300
    %1995 = vmatpush1.bf16.msra.mxu0 %v1299
    %1996 = vmatprep.subr.bf16.mxu0 %v1294
    %1997 = vmatpush1.bf16.msra.mxu0 %v1293
    %1998 = vmatprep.subr.bf16.mxu0 %v1288
    %1999 = vmatpush1.bf16.msra.mxu0 %v1287
    %2000 = vmatprep.subr.bf16.mxu0 %v1378
    %2001 = vmatpush2.bf16.msra.mxu0 %v1377
    %2002 = vmatprep.subr.bf16.mxu0 %v1372
    %2003 = vmatpush2.bf16.msra.mxu0 %v1371
    %2004 = vmatprep.subr.bf16.mxu0 %v1366
    %2005 = vmatpush2.bf16.msra.mxu0 %v1365
    %2006 = vmatprep.subr.bf16.mxu0 %v1360
    %2007 = vmatpush2.bf16.msra.mxu0 %v1359
    %2008 = vmatprep.subr.bf16.mxu0 %v1354
    %2009 = vmatpush2.bf16.msra.mxu0 %v1353
    %2010 = vmatprep.subr.bf16.mxu0 %v1348
    %2011 = vmatpush2.bf16.msra.mxu0 %v1347
    %2012 = vmatprep.subr.bf16.mxu0 %v1342
    %2013 = vmatpush2.bf16.msra.mxu0 %v1341
    %2014 = vmatprep.subr.bf16.mxu0 %v1336
    %2015 = vmatpush2.bf16.msra.mxu0 %v1335
    %2016 = vmatprep.mubr.bf16.mxu0 %v410
    %2017 = vmatmul.mubr.bf16.gmra.mxu0 %v409
    %v2018 = vpop.f32.mrf.mxu0
    %v2019 = vadd.f32 %v381, %v2018
    %v2020 = vpop.f32.mrf.mxu0
    %v2021 = vadd.f32 %v385, %v2020
    %v2022 = vpop.f32.mrf.mxu0
    %v2023 = vpop.f32.mrf.mxu0
    %2024 = vdwg.mxu0
    %2025 = vmatprep.subr.bf16.mxu0 %v1426
    %2026 = vmatpush1.bf16.msra.mxu0 %v1425
    %2027 = vmatprep.subr.bf16.mxu0 %v1420
    %2028 = vmatpush1.bf16.msra.mxu0 %v1419
    %2029 = vmatprep.subr.bf16.mxu0 %v1414
    %2030 = vmatpush1.bf16.msra.mxu0 %v1413
    %2031 = vmatprep.subr.bf16.mxu0 %v1408
    %2032 = vmatpush1.bf16.msra.mxu0 %v1407
    %2033 = vmatprep.subr.bf16.mxu0 %v1402
    %2034 = vmatpush1.bf16.msra.mxu0 %v1401
    %2035 = vmatprep.subr.bf16.mxu0 %v1396
    %2036 = vmatpush1.bf16.msra.mxu0 %v1395
    %2037 = vmatprep.subr.bf16.mxu0 %v1390
    %2038 = vmatpush1.bf16.msra.mxu0 %v1389
    %2039 = vmatprep.subr.bf16.mxu0 %v1384
    %2040 = vmatpush1.bf16.msra.mxu0 %v1383
    %2041 = vmatprep.subr.bf16.mxu0 %v1474
    %2042 = vmatpush2.bf16.msra.mxu0 %v1473
    %2043 = vmatprep.subr.bf16.mxu0 %v1468
    %2044 = vmatpush2.bf16.msra.mxu0 %v1467
    %2045 = vmatprep.subr.bf16.mxu0 %v1462
    %2046 = vmatpush2.bf16.msra.mxu0 %v1461
    %2047 = vmatprep.subr.bf16.mxu0 %v1456
    %2048 = vmatpush2.bf16.msra.mxu0 %v1455
    %2049 = vmatprep.subr.bf16.mxu0 %v1450
    %2050 = vmatpush2.bf16.msra.mxu0 %v1449
    %2051 = vmatprep.subr.bf16.mxu0 %v1444
    %2052 = vmatpush2.bf16.msra.mxu0 %v1443
    %2053 = vmatprep.subr.bf16.mxu0 %v1438
    %2054 = vmatpush2.bf16.msra.mxu0 %v1437
    %2055 = vmatprep.subr.bf16.mxu0 %v1432
    %2056 = vmatpush2.bf16.msra.mxu0 %v1431
    %2057 = vmatprep.mubr.bf16.mxu0 %v412
    %2058 = vmatmul.mubr.bf16.gmra.mxu0 %v411
    %v2059 = vpop.f32.mrf.mxu0
    %v2060 = vadd.f32 %v2019, %v2059
    %v2061 = vpop.f32.mrf.mxu0
    %v2062 = vadd.f32 %v2021, %v2061
    %v2063 = vpop.f32.mrf.mxu0
    %v2064 = vpop.f32.mrf.mxu0
    %2065 = vdwg.mxu0
    %2066 = vmatprep.subr.bf16.mxu0 %v1522
    %2067 = vmatpush1.bf16.msra.mxu0 %v1521
    %2068 = vmatprep.subr.bf16.mxu0 %v1516
    %2069 = vmatpush1.bf16.msra.mxu0 %v1515
    %2070 = vmatprep.subr.bf16.mxu0 %v1510
    %2071 = vmatpush1.bf16.msra.mxu0 %v1509
    %2072 = vmatprep.subr.bf16.mxu0 %v1504
    %2073 = vmatpush1.bf16.msra.mxu0 %v1503
    %2074 = vmatprep.subr.bf16.mxu0 %v1498
    %2075 = vmatpush1.bf16.msra.mxu0 %v1497
    %2076 = vmatprep.subr.bf16.mxu0 %v1492
    %2077 = vmatpush1.bf16.msra.mxu0 %v1491
    %2078 = vmatprep.subr.bf16.mxu0 %v1486
    %2079 = vmatpush1.bf16.msra.mxu0 %v1485
    %2080 = vmatprep.subr.bf16.mxu0 %v1480
    %2081 = vmatpush1.bf16.msra.mxu0 %v1479
    %2082 = vmatprep.subr.bf16.mxu0 %v1570
    %2083 = vmatpush2.bf16.msra.mxu0 %v1569
    %2084 = vmatprep.subr.bf16.mxu0 %v1564
    %2085 = vmatpush2.bf16.msra.mxu0 %v1563
    %2086 = vmatprep.subr.bf16.mxu0 %v1558
    %2087 = vmatpush2.bf16.msra.mxu0 %v1557
    %2088 = vmatprep.subr.bf16.mxu0 %v1552
    %2089 = vmatpush2.bf16.msra.mxu0 %v1551
    %2090 = vmatprep.subr.bf16.mxu0 %v1546
    %2091 = vmatpush2.bf16.msra.mxu0 %v1545
    %2092 = vmatprep.subr.bf16.mxu0 %v1540
    %2093 = vmatpush2.bf16.msra.mxu0 %v1539
    %2094 = vmatprep.subr.bf16.mxu0 %v1534
    %2095 = vmatpush2.bf16.msra.mxu0 %v1533
    %2096 = vmatprep.subr.bf16.mxu0 %v1528
    %2097 = vmatpush2.bf16.msra.mxu0 %v1527
    %2098 = vmatprep.mubr.bf16.mxu0 %v414
    %2099 = vmatmul.mubr.bf16.gmra.mxu0 %v413
    %v2100 = vpop.f32.mrf.mxu0
    %v2101 = vadd.f32 %v2060, %v2100
    %v2102 = vpop.f32.mrf.mxu0
    %v2103 = vadd.f32 %v2062, %v2102
    %v2104 = vpop.f32.mrf.mxu0
    %v2105 = vpop.f32.mrf.mxu0
    %2106 = vdwg.mxu0
    %2107 = vmatprep.subr.bf16.mxu0 %v1332
    %2108 = vmatpush1.bf16.msra.mxu0 %v1331
    %2109 = vmatprep.subr.bf16.mxu0 %v1326
    %2110 = vmatpush1.bf16.msra.mxu0 %v1325
    %2111 = vmatprep.subr.bf16.mxu0 %v1320
    %2112 = vmatpush1.bf16.msra.mxu0 %v1319
    %2113 = vmatprep.subr.bf16.mxu0 %v1314
    %2114 = vmatpush1.bf16.msra.mxu0 %v1313
    %2115 = vmatprep.subr.bf16.mxu0 %v1308
    %2116 = vmatpush1.bf16.msra.mxu0 %v1307
    %2117 = vmatprep.subr.bf16.mxu0 %v1302
    %2118 = vmatpush1.bf16.msra.mxu0 %v1301
    %2119 = vmatprep.subr.bf16.mxu0 %v1296
    %2120 = vmatpush1.bf16.msra.mxu0 %v1295
    %2121 = vmatprep.subr.bf16.mxu0 %v1290
    %2122 = vmatpush1.bf16.msra.mxu0 %v1289
    %2123 = vmatprep.subr.bf16.mxu0 %v1380
    %2124 = vmatpush2.bf16.msra.mxu0 %v1379
    %2125 = vmatprep.subr.bf16.mxu0 %v1374
    %2126 = vmatpush2.bf16.msra.mxu0 %v1373
    %2127 = vmatprep.subr.bf16.mxu0 %v1368
    %2128 = vmatpush2.bf16.msra.mxu0 %v1367
    %2129 = vmatprep.subr.bf16.mxu0 %v1362
    %2130 = vmatpush2.bf16.msra.mxu0 %v1361
    %2131 = vmatprep.subr.bf16.mxu0 %v1356
    %2132 = vmatpush2.bf16.msra.mxu0 %v1355
    %2133 = vmatprep.subr.bf16.mxu0 %v1350
    %2134 = vmatpush2.bf16.msra.mxu0 %v1349
    %2135 = vmatprep.subr.bf16.mxu0 %v1344
    %2136 = vmatpush2.bf16.msra.mxu0 %v1343
    %2137 = vmatprep.subr.bf16.mxu0 %v1338
    %2138 = vmatpush2.bf16.msra.mxu0 %v1337
    %2139 = vmatprep.mubr.bf16.mxu0 %v410
    %2140 = vmatmul.mubr.bf16.gmra.mxu0 %v409
    %v2141 = vpop.f32.mrf.mxu0
    %v2142 = vadd.f32 %v389, %v2141
    %v2143 = vpop.f32.mrf.mxu0
    %v2144 = vadd.f32 %v393, %v2143
    %v2145 = vpop.f32.mrf.mxu0
    %v2146 = vpop.f32.mrf.mxu0
    %2147 = vdwg.mxu0
    %2148 = vmatprep.subr.bf16.mxu0 %v1428
    %2149 = vmatpush1.bf16.msra.mxu0 %v1427
    %2150 = vmatprep.subr.bf16.mxu0 %v1422
    %2151 = vmatpush1.bf16.msra.mxu0 %v1421
    %2152 = vmatprep.subr.bf16.mxu0 %v1416
    %2153 = vmatpush1.bf16.msra.mxu0 %v1415
    %2154 = vmatprep.subr.bf16.mxu0 %v1410
    %2155 = vmatpush1.bf16.msra.mxu0 %v1409
    %2156 = vmatprep.subr.bf16.mxu0 %v1404
    %2157 = vmatpush1.bf16.msra.mxu0 %v1403
    %2158 = vmatprep.subr.bf16.mxu0 %v1398
    %2159 = vmatpush1.bf16.msra.mxu0 %v1397
    %2160 = vmatprep.subr.bf16.mxu0 %v1392
    %2161 = vmatpush1.bf16.msra.mxu0 %v1391
    %2162 = vmatprep.subr.bf16.mxu0 %v1386
    %2163 = vmatpush1.bf16.msra.mxu0 %v1385
    %2164 = vmatprep.subr.bf16.mxu0 %v1476
    %2165 = vmatpush2.bf16.msra.mxu0 %v1475
    %2166 = vmatprep.subr.bf16.mxu0 %v1470
    %2167 = vmatpush2.bf16.msra.mxu0 %v1469
    %2168 = vmatprep.subr.bf16.mxu0 %v1464
    %2169 = vmatpush2.bf16.msra.mxu0 %v1463
    %2170 = vmatprep.subr.bf16.mxu0 %v1458
    %2171 = vmatpush2.bf16.msra.mxu0 %v1457
    %2172 = vmatprep.subr.bf16.mxu0 %v1452
    %2173 = vmatpush2.bf16.msra.mxu0 %v1451
    %2174 = vmatprep.subr.bf16.mxu0 %v1446
    %2175 = vmatpush2.bf16.msra.mxu0 %v1445
    %2176 = vmatprep.subr.bf16.mxu0 %v1440
    %2177 = vmatpush2.bf16.msra.mxu0 %v1439
    %2178 = vmatprep.subr.bf16.mxu0 %v1434
    %2179 = vmatpush2.bf16.msra.mxu0 %v1433
    %2180 = vmatprep.mubr.bf16.mxu0 %v412
    %2181 = vmatmul.mubr.bf16.gmra.mxu0 %v411
    %v2182 = vpop.f32.mrf.mxu0
    %v2183 = vadd.f32 %v2142, %v2182
    %v2184 = vpop.f32.mrf.mxu0
    %v2185 = vadd.f32 %v2144, %v2184
    %v2186 = vpop.f32.mrf.mxu0
    %v2187 = vpop.f32.mrf.mxu0
    %2188 = vdwg.mxu0
    %2189 = vmatprep.subr.bf16.mxu0 %v1524
    %2190 = vmatpush1.bf16.msra.mxu0 %v1523
    %2191 = vmatprep.subr.bf16.mxu0 %v1518
    %2192 = vmatpush1.bf16.msra.mxu0 %v1517
    %2193 = vmatprep.subr.bf16.mxu0 %v1512
    %2194 = vmatpush1.bf16.msra.mxu0 %v1511
    %2195 = vmatprep.subr.bf16.mxu0 %v1506
    %2196 = vmatpush1.bf16.msra.mxu0 %v1505
    %2197 = vmatprep.subr.bf16.mxu0 %v1500
    %2198 = vmatpush1.bf16.msra.mxu0 %v1499
    %2199 = vmatprep.subr.bf16.mxu0 %v1494
    %2200 = vmatpush1.bf16.msra.mxu0 %v1493
    %2201 = vmatprep.subr.bf16.mxu0 %v1488
    %2202 = vmatpush1.bf16.msra.mxu0 %v1487
    %2203 = vmatprep.subr.bf16.mxu0 %v1482
    %2204 = vmatpush1.bf16.msra.mxu0 %v1481
    %2205 = vmatprep.subr.bf16.mxu0 %v1572
    %2206 = vmatpush2.bf16.msra.mxu0 %v1571
    %2207 = vmatprep.subr.bf16.mxu0 %v1566
    %2208 = vmatpush2.bf16.msra.mxu0 %v1565
    %2209 = vmatprep.subr.bf16.mxu0 %v1560
    %2210 = vmatpush2.bf16.msra.mxu0 %v1559
    %2211 = vmatprep.subr.bf16.mxu0 %v1554
    %2212 = vmatpush2.bf16.msra.mxu0 %v1553
    %2213 = vmatprep.subr.bf16.mxu0 %v1548
    %2214 = vmatpush2.bf16.msra.mxu0 %v1547
    %2215 = vmatprep.subr.bf16.mxu0 %v1542
    %2216 = vmatpush2.bf16.msra.mxu0 %v1541
    %2217 = vmatprep.subr.bf16.mxu0 %v1536
    %2218 = vmatpush2.bf16.msra.mxu0 %v1535
    %2219 = vmatprep.subr.bf16.mxu0 %v1530
    %2220 = vmatpush2.bf16.msra.mxu0 %v1529
    %2221 = vmatprep.mubr.bf16.mxu0 %v414
    %2222 = vmatmul.mubr.bf16.gmra.mxu0 %v413
    %v2223 = vpop.f32.mrf.mxu0
    %v2224 = vadd.f32 %v2183, %v2223
    %v2225 = vpop.f32.mrf.mxu0
    %v2226 = vadd.f32 %v2185, %v2225
    %v2227 = vpop.f32.mrf.mxu0
    %v2228 = vpop.f32.mrf.mxu0
    %2229 = vdwg.mxu0
    %v2230 = vmul.f32 %v1978, 0.2
    %v2231 = vmul.f32 %v1980, 0.2
    %v2232 = vmul.f32 %v2101, 0.2
    %v2233 = vmul.f32 %v2103, 0.2
    %v2234 = vmul.f32 %v2224, 0.2
    %v2235 = vmul.f32 %v2226, 0.2
    %v2236 = vmax.f32 %v1978, %v2230
    %v2237 = vmax.f32 %v1980, %v2231
    %v2238 = vmax.f32 %v2101, %v2232
    %v2239 = vmax.f32 %v2103, %v2233
    %v2240 = vmax.f32 %v2224, %v2234
    %v2241 = vmax.f32 %v2226, %v2235
    %2242 = vst [vmem:[#allocation10] sm:$0xff] %v2236
    %2243 = vst [vmem:[#allocation10 + $0x8] sm:$0xff] %v2237
    %2244 = vst [vmem:[#allocation10 + $0x10] sm:$0xff] %v2238
    %2245 = vst [vmem:[#allocation10 + $0x18] sm:$0xff] %v2239
    %2246 = vst [vmem:[#allocation10 + $0x20] sm:$0xff] %v2240
    %2247 = vst [vmem:[#allocation10 + $0x28] sm:$0xff] %v2241
    %v2248 = vpack.c.bf16 %v2236, %v2236
    %v2249 = vpack.c.bf16 %v2237, %v2237
    %v2250 = vpack.c.bf16 %v2238, %v2238
    %v2251 = vpack.c.bf16 %v2239, %v2239
    %v2252 = vpack.c.bf16 %v2240, %v2240
    %v2253 = vpack.c.bf16 %v2241, %v2241
    %v2254 = vld [vmem:[#allocation7] sm:$0xf]
    %v2255 = vld [vmem:[#allocation7 + $0x4] sm:$0xf]
    %v2256 = vld [vmem:[#allocation7 + $0x8] sm:$0xf]
    %v2257 = vld [vmem:[#allocation7 + $0xc] sm:$0xf]
    %v2258 = vld [vmem:[#allocation7 + $0x10] sm:$0xf]
    %v2259 = vld [vmem:[#allocation7 + $0x14] sm:$0xf]
    %v2260 = vld [vmem:[#allocation7 + $0x18] sm:$0xf]
    %v2261 = vld [vmem:[#allocation7 + $0x1c] sm:$0xf]
    %v2262 = vld [vmem:[#allocation7 + $0x20] sm:$0xf]
    %v2263 = vld [vmem:[#allocation7 + $0x24] sm:$0xf]
    %v2264 = vld [vmem:[#allocation7 + $0x28] sm:$0xf]
    %v2265 = vld [vmem:[#allocation7 + $0x2c] sm:$0xf]
    %v2266 = vld [vmem:[#allocation7 + $0x30] sm:$0xf]
    %v2267 = vld [vmem:[#allocation7 + $0x34] sm:$0xf]
    %v2268 = vld [vmem:[#allocation7 + $0x38] sm:$0xf]
    %v2269 = vld [vmem:[#allocation7 + $0x3c] sm:$0xf]
    %v2270 = vld [vmem:[#allocation7 + $0x40] sm:$0xf]
    %v2271 = vld [vmem:[#allocation7 + $0x44] sm:$0xf]
    %v2272 = vld [vmem:[#allocation7 + $0x48] sm:$0xf]
    %v2273 = vld [vmem:[#allocation7 + $0x4c] sm:$0xf]
    %v2274 = vld [vmem:[#allocation7 + $0x50] sm:$0xf]
    %v2275 = vld [vmem:[#allocation7 + $0x54] sm:$0xf]
    %v2276 = vld [vmem:[#allocation7 + $0x58] sm:$0xf]
    %v2277 = vld [vmem:[#allocation7 + $0x5c] sm:$0xf]
    %v2278 = vld [vmem:[#allocation7 + $0x60] sm:$0xf]
    %v2279 = vld [vmem:[#allocation7 + $0x64] sm:$0xf]
    %v2280 = vld [vmem:[#allocation7 + $0x68] sm:$0xf]
    %v2281 = vld [vmem:[#allocation7 + $0x6c] sm:$0xf]
    %v2282 = vld [vmem:[#allocation7 + $0x70] sm:$0xf]
    %v2283 = vld [vmem:[#allocation7 + $0x74] sm:$0xf]
    %v2284 = vld [vmem:[#allocation7 + $0x78] sm:$0xf]
    %v2285 = vld [vmem:[#allocation7 + $0x7c] sm:$0xf]
    %v2286 = vld [vmem:[#allocation7 + $0x80] sm:$0xf]
    %v2287 = vld [vmem:[#allocation7 + $0x84] sm:$0xf]
    %v2288 = vld [vmem:[#allocation7 + $0x88] sm:$0xf]
    %v2289 = vld [vmem:[#allocation7 + $0x8c] sm:$0xf]
    %v2290 = vld [vmem:[#allocation7 + $0x90] sm:$0xf]
    %v2291 = vld [vmem:[#allocation7 + $0x94] sm:$0xf]
    %v2292 = vld [vmem:[#allocation7 + $0x98] sm:$0xf]
    %v2293 = vld [vmem:[#allocation7 + $0x9c] sm:$0xf]
    %v2294 = vld [vmem:[#allocation7 + $0xa0] sm:$0xf]
    %v2295 = vld [vmem:[#allocation7 + $0xa4] sm:$0xf]
    %v2296 = vld [vmem:[#allocation7 + $0xa8] sm:$0xf]
    %v2297 = vld [vmem:[#allocation7 + $0xac] sm:$0xf]
    %v2298 = vld [vmem:[#allocation7 + $0xb0] sm:$0xf]
    %v2299 = vld [vmem:[#allocation7 + $0xb4] sm:$0xf]
    %v2300 = vld [vmem:[#allocation7 + $0xb8] sm:$0xf]
    %v2301 = vld [vmem:[#allocation7 + $0xbc] sm:$0xf]
    %v2302 = vld [vmem:[#allocation7 + $0xc0] sm:$0xf]
    %v2303 = vld [vmem:[#allocation7 + $0xc4] sm:$0xf]
    %v2304 = vld [vmem:[#allocation7 + $0xc8] sm:$0xf]
    %v2305 = vld [vmem:[#allocation7 + $0xcc] sm:$0xf]
    %v2306 = vld [vmem:[#allocation7 + $0xd0] sm:$0xf]
    %v2307 = vld [vmem:[#allocation7 + $0xd4] sm:$0xf]
    %v2308 = vld [vmem:[#allocation7 + $0xd8] sm:$0xf]
    %v2309 = vld [vmem:[#allocation7 + $0xdc] sm:$0xf]
    %v2310 = vld [vmem:[#allocation7 + $0xe0] sm:$0xf]
    %v2311 = vld [vmem:[#allocation7 + $0xe4] sm:$0xf]
    %v2312 = vld [vmem:[#allocation7 + $0xe8] sm:$0xf]
    %v2313 = vld [vmem:[#allocation7 + $0xec] sm:$0xf]
    %v2314 = vld [vmem:[#allocation7 + $0xf0] sm:$0xf]
    %v2315 = vld [vmem:[#allocation7 + $0xf4] sm:$0xf]
    %v2316 = vld [vmem:[#allocation7 + $0xf8] sm:$0xf]
    %v2317 = vld [vmem:[#allocation7 + $0xfc] sm:$0xf]
    %v2318 = vld [vmem:[#allocation7 + $0x100] sm:$0xf]
    %v2319 = vld [vmem:[#allocation7 + $0x104] sm:$0xf]
    %v2320 = vld [vmem:[#allocation7 + $0x108] sm:$0xf]
    %v2321 = vld [vmem:[#allocation7 + $0x10c] sm:$0xf]
    %v2322 = vld [vmem:[#allocation7 + $0x110] sm:$0xf]
    %v2323 = vld [vmem:[#allocation7 + $0x114] sm:$0xf]
    %v2324 = vld [vmem:[#allocation7 + $0x118] sm:$0xf]
    %v2325 = vld [vmem:[#allocation7 + $0x11c] sm:$0xf]
    %v2326 = vld [vmem:[#allocation7 + $0x120] sm:$0xf]
    %v2327 = vld [vmem:[#allocation7 + $0x124] sm:$0xf]
    %v2328 = vld [vmem:[#allocation7 + $0x128] sm:$0xf]
    %v2329 = vld [vmem:[#allocation7 + $0x12c] sm:$0xf]
    %v2330 = vld [vmem:[#allocation7 + $0x130] sm:$0xf]
    %v2331 = vld [vmem:[#allocation7 + $0x134] sm:$0xf]
    %v2332 = vld [vmem:[#allocation7 + $0x138] sm:$0xf]
    %v2333 = vld [vmem:[#allocation7 + $0x13c] sm:$0xf]
    %v2334 = vld [vmem:[#allocation7 + $0x140] sm:$0xf]
    %v2335 = vld [vmem:[#allocation7 + $0x144] sm:$0xf]
    %v2336 = vld [vmem:[#allocation7 + $0x148] sm:$0xf]
    %v2337 = vld [vmem:[#allocation7 + $0x14c] sm:$0xf]
    %v2338 = vld [vmem:[#allocation7 + $0x150] sm:$0xf]
    %v2339 = vld [vmem:[#allocation7 + $0x154] sm:$0xf]
    %v2340 = vld [vmem:[#allocation7 + $0x158] sm:$0xf]
    %v2341 = vld [vmem:[#allocation7 + $0x15c] sm:$0xf]
    %v2342 = vld [vmem:[#allocation7 + $0x160] sm:$0xf]
    %v2343 = vld [vmem:[#allocation7 + $0x164] sm:$0xf]
    %v2344 = vld [vmem:[#allocation7 + $0x168] sm:$0xf]
    %v2345 = vld [vmem:[#allocation7 + $0x16c] sm:$0xf]
    %v2346 = vld [vmem:[#allocation7 + $0x170] sm:$0xf]
    %v2347 = vld [vmem:[#allocation7 + $0x174] sm:$0xf]
    %v2348 = vld [vmem:[#allocation7 + $0x178] sm:$0xf]
    %v2349 = vld [vmem:[#allocation7 + $0x17c] sm:$0xf]
    %v2350 = vld [vmem:[#allocation8] sm:$0x1]
    %v2352 = vlaneseq
    %v2353 = vshrl.u32 %v2352, 7
    %v2354 = vsub.s32 0, %v2353
    %v2355 = vrot.slane %v2350, %v2354
    %v2453 = vunpack.c.l.b16 %v2254
    %v2454 = vunpack.c.l.b16 %v2255
    %v2455 = vunpack.c.l.b16 %v2256
    %v2456 = vunpack.c.l.b16 %v2257
    %v2457 = vunpack.c.l.b16 %v2258
    %v2458 = vunpack.c.l.b16 %v2259
    %v2459 = vunpack.c.l.b16 %v2260
    %v2460 = vunpack.c.l.b16 %v2261
    %v2461 = vunpack.c.l.b16 %v2262
    %v2462 = vunpack.c.l.b16 %v2263
    %v2463 = vunpack.c.l.b16 %v2264
    %v2464 = vunpack.c.l.b16 %v2265
    %v2465 = vunpack.c.l.b16 %v2266
    %v2466 = vunpack.c.l.b16 %v2267
    %v2467 = vunpack.c.l.b16 %v2268
    %v2468 = vunpack.c.l.b16 %v2269
    %v2469 = vunpack.c.l.b16 %v2270
    %v2470 = vunpack.c.l.b16 %v2271
    %v2471 = vunpack.c.l.b16 %v2272
    %v2472 = vunpack.c.l.b16 %v2273
    %v2473 = vunpack.c.l.b16 %v2274
    %v2474 = vunpack.c.l.b16 %v2275
    %v2475 = vunpack.c.l.b16 %v2276
    %v2476 = vunpack.c.l.b16 %v2277
    %v2477 = vunpack.c.l.b16 %v2278
    %v2478 = vunpack.c.l.b16 %v2279
    %v2479 = vunpack.c.l.b16 %v2280
    %v2480 = vunpack.c.l.b16 %v2281
    %v2481 = vunpack.c.l.b16 %v2282
    %v2482 = vunpack.c.l.b16 %v2283
    %v2483 = vunpack.c.l.b16 %v2284
    %v2484 = vunpack.c.l.b16 %v2285
    %v2485 = vunpack.c.l.b16 %v2286
    %v2486 = vunpack.c.l.b16 %v2287
    %v2487 = vunpack.c.l.b16 %v2288
    %v2488 = vunpack.c.l.b16 %v2289
    %v2489 = vunpack.c.l.b16 %v2290
    %v2490 = vunpack.c.l.b16 %v2291
    %v2491 = vunpack.c.l.b16 %v2292
    %v2492 = vunpack.c.l.b16 %v2293
    %v2493 = vunpack.c.l.b16 %v2294
    %v2494 = vunpack.c.l.b16 %v2295
    %v2495 = vunpack.c.l.b16 %v2296
    %v2496 = vunpack.c.l.b16 %v2297
    %v2497 = vunpack.c.l.b16 %v2298
    %v2498 = vunpack.c.l.b16 %v2299
    %v2499 = vunpack.c.l.b16 %v2300
    %v2500 = vunpack.c.l.b16 %v2301
    %v2501 = vunpack.c.l.b16 %v2302
    %v2502 = vunpack.c.l.b16 %v2303
    %v2503 = vunpack.c.l.b16 %v2304
    %v2504 = vunpack.c.l.b16 %v2305
    %v2505 = vunpack.c.l.b16 %v2306
    %v2506 = vunpack.c.l.b16 %v2307
    %v2507 = vunpack.c.l.b16 %v2308
    %v2508 = vunpack.c.l.b16 %v2309
    %v2509 = vunpack.c.l.b16 %v2310
    %v2510 = vunpack.c.l.b16 %v2311
    %v2511 = vunpack.c.l.b16 %v2312
    %v2512 = vunpack.c.l.b16 %v2313
    %v2513 = vunpack.c.l.b16 %v2314
    %v2514 = vunpack.c.l.b16 %v2315
    %v2515 = vunpack.c.l.b16 %v2316
    %v2516 = vunpack.c.l.b16 %v2317
    %v2517 = vunpack.c.l.b16 %v2318
    %v2518 = vunpack.c.l.b16 %v2319
    %v2519 = vunpack.c.l.b16 %v2320
    %v2520 = vunpack.c.l.b16 %v2321
    %v2521 = vunpack.c.l.b16 %v2322
    %v2522 = vunpack.c.l.b16 %v2323
    %v2523 = vunpack.c.l.b16 %v2324
    %v2524 = vunpack.c.l.b16 %v2325
    %v2525 = vunpack.c.l.b16 %v2326
    %v2526 = vunpack.c.l.b16 %v2327
    %v2527 = vunpack.c.l.b16 %v2328
    %v2528 = vunpack.c.l.b16 %v2329
    %v2529 = vunpack.c.l.b16 %v2330
    %v2530 = vunpack.c.l.b16 %v2331
    %v2531 = vunpack.c.l.b16 %v2332
    %v2532 = vunpack.c.l.b16 %v2333
    %v2533 = vunpack.c.l.b16 %v2334
    %v2534 = vunpack.c.l.b16 %v2335
    %v2535 = vunpack.c.l.b16 %v2336
    %v2536 = vunpack.c.l.b16 %v2337
    %v2537 = vunpack.c.l.b16 %v2338
    %v2538 = vunpack.c.l.b16 %v2339
    %v2539 = vunpack.c.l.b16 %v2340
    %v2540 = vunpack.c.l.b16 %v2341
    %v2541 = vunpack.c.l.b16 %v2342
    %v2542 = vunpack.c.l.b16 %v2343
    %v2543 = vunpack.c.l.b16 %v2344
    %v2544 = vunpack.c.l.b16 %v2345
    %v2545 = vunpack.c.l.b16 %v2346
    %v2546 = vunpack.c.l.b16 %v2347
    %v2547 = vunpack.c.l.b16 %v2348
    %v2548 = vunpack.c.l.b16 %v2349
    %v2549 = vpack.c.b16 %v2454, %v2453
    %v2550 = vpack.c.b16 %v2456, %v2455
    %v2551 = vpack.c.b16 %v2458, %v2457
    %v2552 = vpack.c.b16 %v2460, %v2459
    %v2553 = vpack.c.b16 %v2462, %v2461
    %v2554 = vpack.c.b16 %v2464, %v2463
    %v2555 = vpack.c.b16 %v2466, %v2465
    %v2556 = vpack.c.b16 %v2468, %v2467
    %v2557 = vpack.c.b16 %v2470, %v2469
    %v2558 = vpack.c.b16 %v2472, %v2471
    %v2559 = vpack.c.b16 %v2474, %v2473
    %v2560 = vpack.c.b16 %v2476, %v2475
    %v2561 = vpack.c.b16 %v2478, %v2477
    %v2562 = vpack.c.b16 %v2480, %v2479
    %v2563 = vpack.c.b16 %v2482, %v2481
    %v2564 = vpack.c.b16 %v2484, %v2483
    %v2565 = vpack.c.b16 %v2486, %v2485
    %v2566 = vpack.c.b16 %v2488, %v2487
    %v2567 = vpack.c.b16 %v2490, %v2489
    %v2568 = vpack.c.b16 %v2492, %v2491
    %v2569 = vpack.c.b16 %v2494, %v2493
    %v2570 = vpack.c.b16 %v2496, %v2495
    %v2571 = vpack.c.b16 %v2498, %v2497
    %v2572 = vpack.c.b16 %v2500, %v2499
    %v2573 = vpack.c.b16 %v2502, %v2501
    %v2574 = vpack.c.b16 %v2504, %v2503
    %v2575 = vpack.c.b16 %v2506, %v2505
    %v2576 = vpack.c.b16 %v2508, %v2507
    %v2577 = vpack.c.b16 %v2510, %v2509
    %v2578 = vpack.c.b16 %v2512, %v2511
    %v2579 = vpack.c.b16 %v2514, %v2513
    %v2580 = vpack.c.b16 %v2516, %v2515
    %v2581 = vpack.c.b16 %v2518, %v2517
    %v2582 = vpack.c.b16 %v2520, %v2519
    %v2583 = vpack.c.b16 %v2522, %v2521
    %v2584 = vpack.c.b16 %v2524, %v2523
    %v2585 = vpack.c.b16 %v2526, %v2525
    %v2586 = vpack.c.b16 %v2528, %v2527
    %v2587 = vpack.c.b16 %v2530, %v2529
    %v2588 = vpack.c.b16 %v2532, %v2531
    %v2589 = vpack.c.b16 %v2534, %v2533
    %v2590 = vpack.c.b16 %v2536, %v2535
    %v2591 = vpack.c.b16 %v2538, %v2537
    %v2592 = vpack.c.b16 %v2540, %v2539
    %v2593 = vpack.c.b16 %v2542, %v2541
    %v2594 = vpack.c.b16 %v2544, %v2543
    %v2595 = vpack.c.b16 %v2546, %v2545
    %v2596 = vpack.c.b16 %v2548, %v2547
    %2645 = vmatprep.subr.bf16.mxu0 0
    %2646 = vmatpush1.bf16.msra.mxu0 %v2556
    %2647 = vmatprep.subr.bf16.mxu0 0
    %2648 = vmatpush1.bf16.msra.mxu0 %v2555
    %2649 = vmatprep.subr.bf16.mxu0 0
    %2650 = vmatpush1.bf16.msra.mxu0 %v2554
    %2651 = vmatprep.subr.bf16.mxu0 0
    %2652 = vmatpush1.bf16.msra.mxu0 %v2553
    %2653 = vmatprep.subr.bf16.mxu0 0
    %2654 = vmatpush1.bf16.msra.mxu0 %v2552
    %2655 = vmatprep.subr.bf16.mxu0 0
    %2656 = vmatpush1.bf16.msra.mxu0 %v2551
    %2657 = vmatprep.subr.bf16.mxu0 0
    %2658 = vmatpush1.bf16.msra.mxu0 %v2550
    %2659 = vmatprep.subr.bf16.mxu0 0
    %2660 = vmatpush1.bf16.msra.mxu0 %v2549
    %2661 = vmatprep.subr.bf16.mxu0 0
    %2662 = vmatpush2.bf16.msra.mxu0 %v2564
    %2663 = vmatprep.subr.bf16.mxu0 0
    %2664 = vmatpush2.bf16.msra.mxu0 %v2563
    %2665 = vmatprep.subr.bf16.mxu0 0
    %2666 = vmatpush2.bf16.msra.mxu0 %v2562
    %2667 = vmatprep.subr.bf16.mxu0 0
    %2668 = vmatpush2.bf16.msra.mxu0 %v2561
    %2669 = vmatprep.subr.bf16.mxu0 0
    %2670 = vmatpush2.bf16.msra.mxu0 %v2560
    %2671 = vmatprep.subr.bf16.mxu0 0
    %2672 = vmatpush2.bf16.msra.mxu0 %v2559
    %2673 = vmatprep.subr.bf16.mxu0 0
    %2674 = vmatpush2.bf16.msra.mxu0 %v2558
    %2675 = vmatprep.subr.bf16.mxu0 0
    %2676 = vmatpush2.bf16.msra.mxu0 %v2557
    %2677 = vmatprep.mubr.bf16.mxu0 %v2249
    %2678 = vmatmul.mubr.bf16.gmra.mxu0 %v2248
    %v2679 = vpop.f32.mrf.mxu0
    %v2680 = vadd.f32 %v2355, %v2679
    %v2681 = vpop.f32.mrf.mxu0
    %v2682 = vpop.f32.mrf.mxu0
    %v2683 = vpop.f32.mrf.mxu0
    %2684 = vdwg.mxu0
    %2685 = vmatprep.subr.bf16.mxu0 0
    %2686 = vmatpush1.bf16.msra.mxu0 %v2572
    %2687 = vmatprep.subr.bf16.mxu0 0
    %2688 = vmatpush1.bf16.msra.mxu0 %v2571
    %2689 = vmatprep.subr.bf16.mxu0 0
    %2690 = vmatpush1.bf16.msra.mxu0 %v2570
    %2691 = vmatprep.subr.bf16.mxu0 0
    %2692 = vmatpush1.bf16.msra.mxu0 %v2569
    %2693 = vmatprep.subr.bf16.mxu0 0
    %2694 = vmatpush1.bf16.msra.mxu0 %v2568
    %2695 = vmatprep.subr.bf16.mxu0 0
    %2696 = vmatpush1.bf16.msra.mxu0 %v2567
    %2697 = vmatprep.subr.bf16.mxu0 0
    %2698 = vmatpush1.bf16.msra.mxu0 %v2566
    %2699 = vmatprep.subr.bf16.mxu0 0
    %2700 = vmatpush1.bf16.msra.mxu0 %v2565
    %2701 = vmatprep.subr.bf16.mxu0 0
    %2702 = vmatpush2.bf16.msra.mxu0 %v2580
    %2703 = vmatprep.subr.bf16.mxu0 0
    %2704 = vmatpush2.bf16.msra.mxu0 %v2579
    %2705 = vmatprep.subr.bf16.mxu0 0
    %2706 = vmatpush2.bf16.msra.mxu0 %v2578
    %2707 = vmatprep.subr.bf16.mxu0 0
    %2708 = vmatpush2.bf16.msra.mxu0 %v2577
    %2709 = vmatprep.subr.bf16.mxu0 0
    %2710 = vmatpush2.bf16.msra.mxu0 %v2576
    %2711 = vmatprep.subr.bf16.mxu0 0
    %2712 = vmatpush2.bf16.msra.mxu0 %v2575
    %2713 = vmatprep.subr.bf16.mxu0 0
    %2714 = vmatpush2.bf16.msra.mxu0 %v2574
    %2715 = vmatprep.subr.bf16.mxu0 0
    %2716 = vmatpush2.bf16.msra.mxu0 %v2573
    %2717 = vmatprep.mubr.bf16.mxu0 %v2251
    %2718 = vmatmul.mubr.bf16.gmra.mxu0 %v2250
    %v2719 = vpop.f32.mrf.mxu0
    %v2720 = vadd.f32 %v2680, %v2719
    %v2721 = vpop.f32.mrf.mxu0
    %v2722 = vpop.f32.mrf.mxu0
    %v2723 = vpop.f32.mrf.mxu0
    %2724 = vdwg.mxu0
    %2725 = vmatprep.subr.bf16.mxu0 0
    %2726 = vmatpush1.bf16.msra.mxu0 %v2588
    %2727 = vmatprep.subr.bf16.mxu0 0
    %2728 = vmatpush1.bf16.msra.mxu0 %v2587
    %2729 = vmatprep.subr.bf16.mxu0 0
    %2730 = vmatpush1.bf16.msra.mxu0 %v2586
    %2731 = vmatprep.subr.bf16.mxu0 0
    %2732 = vmatpush1.bf16.msra.mxu0 %v2585
    %2733 = vmatprep.subr.bf16.mxu0 0
    %2734 = vmatpush1.bf16.msra.mxu0 %v2584
    %2735 = vmatprep.subr.bf16.mxu0 0
    %2736 = vmatpush1.bf16.msra.mxu0 %v2583
    %2737 = vmatprep.subr.bf16.mxu0 0
    %2738 = vmatpush1.bf16.msra.mxu0 %v2582
    %2739 = vmatprep.subr.bf16.mxu0 0
    %2740 = vmatpush1.bf16.msra.mxu0 %v2581
    %2741 = vmatprep.subr.bf16.mxu0 0
    %2742 = vmatpush2.bf16.msra.mxu0 %v2596
    %2743 = vmatprep.subr.bf16.mxu0 0
    %2744 = vmatpush2.bf16.msra.mxu0 %v2595
    %2745 = vmatprep.subr.bf16.mxu0 0
    %2746 = vmatpush2.bf16.msra.mxu0 %v2594
    %2747 = vmatprep.subr.bf16.mxu0 0
    %2748 = vmatpush2.bf16.msra.mxu0 %v2593
    %2749 = vmatprep.subr.bf16.mxu0 0
    %2750 = vmatpush2.bf16.msra.mxu0 %v2592
    %2751 = vmatprep.subr.bf16.mxu0 0
    %2752 = vmatpush2.bf16.msra.mxu0 %v2591
    %2753 = vmatprep.subr.bf16.mxu0 0
    %2754 = vmatpush2.bf16.msra.mxu0 %v2590
    %2755 = vmatprep.subr.bf16.mxu0 0
    %2756 = vmatpush2.bf16.msra.mxu0 %v2589
    %2757 = vmatprep.mubr.bf16.mxu0 %v2253
    %2758 = vmatmul.mubr.bf16.gmra.mxu0 %v2252
    %v2759 = vpop.f32.mrf.mxu0
    %v2760 = vadd.f32 %v2720, %v2759
    %v2761 = vpop.f32.mrf.mxu0
    %v2762 = vpop.f32.mrf.mxu0
    %v2763 = vpop.f32.mrf.mxu0
    %2764 = vdwg.mxu0
    %2765 = vst [vmem:[#allocation11] sm:$0xff] %v2760
    %2766 = vmax.xlane.f32.xlu0 %v2760
    %v2767 = vpop.xlane.xlu0 %2766
    %v2768 = vsub.f32 %v2760, %v2767
    %v2769 = vmul.f32 %v2768, 1.442695
    %v2770 = vpow.pop %v2769
    %2771 = vadd.xlane.f32.xlu0 %v2770
    %v2772 = vpop.xlane.xlu0 %2771
    %v2773 = vrcp.pop %v2772
    %v2774 = vmul.f32 1.0, %v2773
    %v2775 = vmul.f32 %v2770, %v2774
    %2776 = vst [vmem:[#allocation13] sm:$0xff] %v2775
    // Predicated region
    $region38: #{discriminator_forward.1} parent=1 // pred_check
      _
    $region39: #{discriminator_forward.1} parent=1 // pred_check_branch
      %2778 = sbr.rel (0) target = $region41
    $region40: #{discriminator_forward.1} parent=1 // pred_region
      %s2780 = ssub.s32 768, 768
      %2781 = vsyncadd [#allocation4], %s2780
      %s2783 = sshll.u32 [#allocation10], 4
      %s2784 = int_to_ptr.vmem [resolvable:$true] %s2783
      %2786 = dma.vmem_to_hbm [thread:$0]  %s2784, 768, %s5, [#allocation4]
    $region41: #{discriminator_forward.1} parent=1 // pred_fallthru
      _
    // Predicated region
    $region42: #{discriminator_forward.1} parent=1 // pred_check
      _
    $region43: #{discriminator_forward.1} parent=1 // pred_check_branch
      %2788 = sbr.rel (0) target = $region45
    $region44: #{discriminator_forward.1} parent=1 // pred_region
      %s2790 = ssub.s32 128, 128
      %2791 = vsyncadd [#allocation12], %s2790
      %s2793 = sshll.u32 [#allocation11], 4
      %s2794 = int_to_ptr.vmem [resolvable:$true] %s2793
      %2796 = dma.vmem_to_hbm [thread:$0]  %s2794, 128, %s6, [#allocation12]
    $region45: #{discriminator_forward.1} parent=1 // pred_fallthru
      _
    // Predicated region
    $region46: #{discriminator_forward.1} parent=1 // pred_check
      _
    $region47: #{discriminator_forward.1} parent=1 // pred_check_branch
      %2798 = sbr.rel (0) target = $region49
    $region48: #{discriminator_forward.1} parent=1 // pred_region
      %s2800 = ssub.s32 128, 128
      %2801 = vsyncadd [#allocation12], %s2800
      %s2803 = sshll.u32 [#allocation13], 4
      %s2804 = int_to_ptr.vmem [resolvable:$true] %s2803
      %2806 = dma.vmem_to_hbm [thread:$0]  %s2804, 128, %s7, [#allocation12]
    $region49: #{discriminator_forward.1} parent=1 // pred_fallthru
      _
    // Predicated region
    $region50: #{discriminator_forward.1} parent=1 // pred_check
      _
    $region51: #{discriminator_forward.1} parent=1 // pred_check_branch
      %2808 = sbr.rel (0) target = $region53
    $region52: #{discriminator_forward.1} parent=1 // pred_region
      %2809 = dma.done [#allocation4], 768
    $region53: #{discriminator_forward.1} parent=1 // pred_fallthru
      _
    // Predicated region
    $region54: #{discriminator_forward.1} parent=1 // pred_check
      _
    $region55: #{discriminator_forward.1} parent=1 // pred_check_branch
      %2811 = sbr.rel (0) target = $region57
    $region56: #{discriminator_forward.1} parent=1 // pred_region
      %2812 = dma.done [#allocation12], 128
    $region57: #{discriminator_forward.1} parent=1 // pred_fallthru
      _
    // Predicated region
    $region58: #{discriminator_forward.1} parent=1 // pred_check
      _
    $region59: #{discriminator_forward.1} parent=1 // pred_check_branch
      %2814 = sbr.rel (0) target = $region61
    $region60: #{discriminator_forward.1} parent=1 // pred_region
      %2815 = dma.done [#allocation12], 128
    $region61: #{discriminator_forward.1} parent=1 // pred_fallthru
      _
    %2816 = vsyncpa [#allocation3], 1
    %2817 = vsyncpa [#allocation6], 1
    %2818 = vsyncpa [#allocation9], 1
    %2819 = vsyncpa [#allocation4], 1
    %2820 = vsyncpa [#allocation12], 1

</llo_original>
